<compile_context>
chip_gen: v7x
topology: tpu7x:2x2x1
jax: 0.10.0
libtpu: 0.0.40
codegen_flags: <defaults>
</compile_context>

<pallas_src>
import functools

import jax
import jax.numpy as jnp
from jax.experimental import pallas as pl
from jax.experimental.pallas import tpu as pltpu

LANE = 128


# ------------------------------ helpers -------------------------------------

def _round_up(x, m):
    return (x + m - 1) // m * m


def _pick_row_tile(ho, wp, target):
    """Largest divisor of Ho <= target with a sublane-aligned flat output block
    (th_out*Wp % 8 == 0); falls back to the whole image (full-extent block)."""
    best = None
    for t in range(1, min(ho, target) + 1):
        if ho % t == 0 and (t * wp) % 8 == 0:
            best = t
    return best if best is not None else ho


def _ds(start, size, stride):
    return pl.ds(start, size) if stride == 1 else pl.ds(start, size, stride)


# ------------------------------ fused kernel --------------------------------

def _inverted_residual_kernel(
    *refs,
    has_expand, use_shortcut, stride, ksize, halo,
    wp_cols, th_out, th_in, hid_p, cout_p, dw_chunk, tail_rows,
):
    if has_expand:
        (x_hbm, mask_ref, we_ref, b1_ref, wdw_ref, b2_ref, wpr_ref, b3_ref,
         o_ref, x_win, hid_buf, dma_sem) = refs
    else:
        (x_hbm, mask_ref, wdw_ref, b2_ref, wpr_ref, b3_ref,
         o_ref, x_win, hid_buf, dma_sem) = refs

    n = pl.program_id(0)
    t = pl.program_id(1)
    n_tiles = pl.num_programs(1)
    slot = t % 2

    rows_in = th_in * wp_cols        # flat rows of the halo'd input window
    rows_out = th_out * wp_cols      # flat rows of the output tile (Wp-wide)
    win_step = th_out * stride * wp_cols

    # ---- double-buffered fetch of the halo'd input row window (HBM -> VMEM) ----
    def start_fetch(tile_idx, slot_idx):
        start = tile_idx * win_step
        pltpu.make_async_copy(x_hbm.at[n, pl.ds(start, rows_in)],
                              x_win.at[slot_idx], dma_sem.at[slot_idx]).start()

    @pl.when(t == 0)                 # prime the first window of this image
    def _():
        start_fetch(0, 0)

    @pl.when(t + 1 < n_tiles)        # prefetch the next window behind compute
    def _():
        start_fetch(t + 1, 1 - slot)

    pltpu.make_async_copy(x_hbm.at[n, pl.ds(0, rows_in)],
                          x_win.at[slot], dma_sem.at[slot]).wait()

    # ---- expand: 1x1 conv (BN folded) + bias + ReLU6  (one MXU matmul) --------
    row0w = pl.multiple_of(t * win_step, win_step)
    msk = mask_ref[pl.ds(row0w, rows_in), :]             # (rows_in, 1) interior
    x2d = x_win[slot]                                    # (rows_in, cin_p)
    if has_expand:
        h = jnp.dot(x2d, we_ref[...], preferred_element_type=jnp.float32)
        h = jnp.clip(h + b1_ref[...], 0.0, 6.0)
    else:
        h = x2d
    # PyTorch zero-pads the *expanded* activation before the depthwise conv, so
    # the spatial halo of the hidden slab must be exactly zero (bias would leak).
    hid_buf[pl.ds(0, rows_in), :] = h * msk
    # Zero the tiny tail so the flat depthwise taps never read uninitialized VMEM.
    hid_buf[pl.ds(rows_in, tail_rows), :] = jnp.zeros((tail_rows, hid_p),
                                                      jnp.float32)

    # ---- depthwise kxk conv + bias + ReLU6, then project 1x1 (+residual) ------
    # Channel-chunked to bound vreg pressure; each chunk contributes one MXU
    # matmul (K = dw_chunk) accumulated into y.
    wdw = wdw_ref[...]                                   # (k*k, hid_p)  hoisted
    b2 = b2_ref[...]                                     # (1, hid_p)    hoisted
    y = jnp.zeros((rows_out, cout_p), jnp.float32)
    for c0 in range(0, hid_p, dw_chunk):
        acc = jnp.zeros((rows_out, dw_chunk), jnp.float32)
        for ki in range(ksize):
            for kj in range(ksize):
                # Flat tap: hid[(ki + r*s)*Wp + kj + w*s] for all (r, w) is a
                # single flat (strided if s>1) slice; columns w >= Wo are junk
                # and are dropped by the wrapper slice.
                tap = hid_buf[_ds(ki * wp_cols + kj, rows_out, stride),
                              pl.ds(c0, dw_chunk)]
                idx = ki * ksize + kj
                w_tap = wdw[idx:idx + 1, c0:c0 + dw_chunk]   # (1, dw_chunk)
                acc = acc + tap * w_tap
        acc = jnp.clip(acc + b2[:, c0:c0 + dw_chunk], 0.0, 6.0)
        y = y + jnp.dot(acc, wpr_ref[pl.ds(c0, dw_chunk), :],
                        preferred_element_type=jnp.float32)
    y = y + b3_ref[...]
    if use_shortcut:                  # stride == 1 and cin_p == cout_p here
        y = y + x_win[slot, pl.ds(halo * wp_cols + halo, rows_out), :]
    o_ref[0] = y.astype(o_ref.dtype)  # single lane-dense store per tile


# ------------------------------ module --------------------------------------

class InvertedResidualPallas:
    def __init__(self, in_channel, out_channel, stride, expand_ratio, key,
                 eps=1e-5, row_tile_target=8):
        hidden = in_channel * expand_ratio
        self.in_channel = in_channel
        self.out_channel = out_channel
        self.stride = stride
        self.expand_ratio = expand_ratio
        self.hidden = hidden
        self.use_shortcut = (stride == 1 and in_channel == out_channel)
        self.ksize = 3
        self.row_tile_target = row_tile_target

        keys = iter(jax.random.split(key, 24))

        def bn_fold(c):
            gamma = 1.0 + 0.1 * jax.random.normal(next(keys), (c,), jnp.float32)
            beta = 0.1 * jax.random.normal(next(keys), (c,), jnp.float32)
            mean = 0.1 * jax.random.normal(next(keys), (c,), jnp.float32)
            var = jnp.abs(jax.random.normal(next(keys), (c,), jnp.float32)) + 0.5
            scale = gamma / jnp.sqrt(var + eps)
            bias = beta - mean * scale
            return scale, bias

        raw = {}
        if expand_ratio != 1:
            # torch Conv2d weight (hidden, in, 1, 1) stored as (in, hidden)
            raw["w_expand"] = 0.1 * jax.random.normal(
                next(keys), (in_channel, hidden), jnp.float32)
            raw["s1"], raw["b1"] = bn_fold(hidden)
        # depthwise weight (hidden, 1, 3, 3) stored as (9, hidden)
        raw["w_dw"] = 0.1 * jax.random.normal(next(keys), (9, hidden), jnp.float32)
        raw["s2"], raw["b2"] = bn_fold(hidden)
        # projection weight (out, hidden, 1, 1) stored as (hidden, out)
        raw["w_proj"] = 0.1 * jax.random.normal(
            next(keys), (hidden, out_channel), jnp.float32)
        raw["s3"], raw["b3"] = bn_fold(out_channel)
        self._raw = raw

        # Lane-padded (multiple-of-128) params, BN scale folded into weights.
        # NOTE: this kernel targets real MobileNet channel counts; tiny C
        # (like the smoke test) pays a large lane-padding bandwidth tax.
        self.cin_p = _round_up(in_channel, LANE)
        self.hid_p = _round_up(hidden, LANE)
        self.cout_p = _round_up(out_channel, LANE)

        def pad2(w, rows, cols):
            return jnp.pad(w, ((0, rows - w.shape[0]), (0, cols - w.shape[1])))

        def pad_bias(v, cols):
            return jnp.pad(v, (0, cols - v.shape[0])).reshape(1, cols)

        if expand_ratio != 1:
            self.w_expand = pad2(raw["w_expand"] * raw["s1"][None, :],
                                 self.cin_p, self.hid_p)
            self.b1 = pad_bias(raw["b1"], self.hid_p)
        self.w_dw = pad2(raw["w_dw"] * raw["s2"][None, :], 9, self.hid_p)
        self.b2 = pad_bias(raw["b2"], self.hid_p)
        self.w_proj = pad2(raw["w_proj"] * raw["s3"][None, :],
                           self.hid_p, self.cout_p)
        self.b3 = pad_bias(raw["b3"], self.cout_p)

    def __call__(self, x_nchw):
        N, C, H, W = x_nchw.shape
        assert C == self.in_channel
        k, s = self.ksize, self.stride
        halo = (k - 1) // 2
        Hp, Wp = H + 2 * halo, W + 2 * halo
        Ho = (Hp - k) // s + 1
        Wo = (Wp - k) // s + 1

        x = jnp.transpose(x_nchw, (0, 2, 3, 1)).astype(jnp.float32)      # NHWC
        x_pad = jnp.pad(x, ((0, 0), (halo, halo), (halo, halo),
                            (0, self.cin_p - C)))
        x_flat = x_pad.reshape(N, Hp * Wp, self.cin_p)    # flat W-major layout

        # Interior (non-halo) mask of the padded grid, flat W-major, built once.
        rr = jnp.arange(Hp).reshape(Hp, 1)
        cc = jnp.arange(Wp).reshape(1, Wp)
        interior = ((rr >= halo) & (rr < Hp - halo) &
                    (cc >= halo) & (cc < Wp - halo))
        mask = interior.astype(jnp.float32).reshape(Hp * Wp, 1)

        th_out = _pick_row_tile(Ho, Wp, self.row_tile_target)
        n_tiles = Ho // th_out
        th_in = (th_out - 1) * s + k
        tail_rows = (s - 1) * Wp + k         # covers junk overshoot of flat taps
        dw_chunk = 256 if self.hid_p % 256 == 0 else 128

        has_expand = self.expand_ratio != 1
        kern = functools.partial(
            _inverted_residual_kernel,
            has_expand=has_expand, use_shortcut=self.use_shortcut,
            stride=s, ksize=k, halo=halo, wp_cols=Wp,
            th_out=th_out, th_in=th_in, hid_p=self.hid_p, cout_p=self.cout_p,
            dw_chunk=dw_chunk, tail_rows=tail_rows)

        resident = lambda n, t: (0, 0)       # weights / biases / mask resident
        in_specs = [pl.BlockSpec(memory_space=pl.ANY),          # raw HBM input
                    pl.BlockSpec((Hp * Wp, 1), resident)]       # pad mask
        args = [x_flat, mask]
        if has_expand:
            in_specs += [pl.BlockSpec((self.cin_p, self.hid_p), resident),
                         pl.BlockSpec((1, self.hid_p), resident)]
            args += [self.w_expand, self.b1]
        in_specs += [pl.BlockSpec((9, self.hid_p), resident),
                     pl.BlockSpec((1, self.hid_p), resident),
                     pl.BlockSpec((self.hid_p, self.cout_p), resident),
                     pl.BlockSpec((1, self.cout_p), resident)]
        args += [self.w_dw, self.b2, self.w_proj, self.b3]

        out_spec = pl.BlockSpec((1, th_out * Wp, self.cout_p),
                                lambda n, t: (n, t, 0))

        y_flat = pl.pallas_call(
            kern,
            out_shape=jax.ShapeDtypeStruct((N, Ho * Wp, self.cout_p),
                                           jnp.float32),
            grid_spec=pltpu.PrefetchScalarGridSpec(
                num_scalar_prefetch=0,
                grid=(N, n_tiles),
                in_specs=in_specs,
                out_specs=out_spec,
                scratch_shapes=[
                    pltpu.VMEM((2, th_in * Wp, self.cin_p), jnp.float32),
                    pltpu.VMEM((th_in * Wp + tail_rows, self.hid_p),
                               jnp.float32),
                    pltpu.SemaphoreType.DMA((2,)),
                ]),
            # Row-tile axis must stay "arbitrary": the cross-step double-buffered
            # DMA assumes sequential t within each image; batch axis -> megacore.
            compiler_params=pltpu.CompilerParams(
                dimension_semantics=("parallel", "arbitrary"),
                vmem_limit_bytes=32 * 1024 * 1024),
        )(*args)

        y = y_flat.reshape(N, Ho, Wp, self.cout_p)[:, :, :Wo, :self.out_channel]
        return jnp.transpose(y, (0, 3, 1, 2))              # back to NCHW


# ------------------------------ pure-JAX reference ---------------------------

def _reference(block, x_nchw):
    """Eval-mode (running-stats BN) reference of the same forward pass."""
    r = block._raw
    k, s = block.ksize, block.stride
    halo = (k - 1) // 2
    x = jnp.transpose(x_nchw, (0, 2, 3, 1)).astype(jnp.float32)
    N, H, W, _ = x.shape
    h = x
    if block.expand_ratio != 1:
        h = jnp.einsum("nhwc,cd->nhwd", h, r["w_expand"],
                       precision=jax.lax.Precision.HIGHEST)
        h = jnp.clip(h * r["s1"] + r["b1"], 0.0, 6.0)
    hp = jnp.pad(h, ((0, 0), (halo, halo), (halo, halo), (0, 0)))
    Ho = (H + 2 * halo - k) // s + 1
    Wo = (W + 2 * halo - k) // s + 1
    acc = jnp.zeros((N, Ho, Wo, block.hidden), jnp.float32)
    for ki in range(k):
        for kj in range(k):
            tap = hp[:, ki:ki + (Ho - 1) * s + 1:s,
                     kj:kj + (Wo - 1) * s + 1:s, :]
            acc = acc + tap * r["w_dw"][ki * k + kj]
    acc = jnp.clip(acc * r["s2"] + r["b2"], 0.0, 6.0)
    y = jnp.einsum("nhwc,cd->nhwd", acc, r["w_proj"],
                   precision=jax.lax.Precision.HIGHEST)
    y = y * r["s3"] + r["b3"]
    if block.use_shortcut:
        y = y + x
    return jnp.transpose(y, (0, 3, 1, 2))


# ------------------------------ main -----------------------------------------

if __name__ == "__main__":
    key = jax.random.PRNGKey(0)
    k_param, k_x = jax.random.split(key)

    in_channel, out_channel, stride, expand_ratio = 4, 4, 1, 2
    block = InvertedResidualPallas(in_channel, out_channel, stride,
                                   expand_ratio, k_param)

    # PyTorch-style NCHW input
    x = jax.random.normal(k_x, (2, in_channel, 16, 16), jnp.float32)

    y = block(x)
    jax.block_until_ready(y)
    assert y.shape == (2, out_channel, 16, 16), y.shape
    assert y.dtype == jnp.float32

    # correctness check against a pure-JAX reference
    y_ref = _reference(block, x)
    max_err = float(jnp.max(jnp.abs(y - y_ref)))
    assert max_err < 3e-2, f"max abs error vs reference: {max_err}"

    print("KERNEL_OK")
</pallas_src>

<mosaic_0001>
module attributes {stable_mosaic.version = 11 : i64} {
  func.func @_inverted_residual_kernel(%arg0: i32, %arg1: i32, %arg2: memref<2x324x128xf32, #tpu.memory_space<any>>, %arg3: memref<324x1xf32, #tpu.memory_space<vmem>>, %arg4: memref<128x128xf32, #tpu.memory_space<vmem>>, %arg5: memref<1x128xf32, #tpu.memory_space<vmem>>, %arg6: memref<9x128xf32, #tpu.memory_space<vmem>>, %arg7: memref<1x128xf32, #tpu.memory_space<vmem>>, %arg8: memref<128x128xf32, #tpu.memory_space<vmem>>, %arg9: memref<1x128xf32, #tpu.memory_space<vmem>>, %arg10: memref<1x144x128xf32, #tpu.memory_space<vmem>>, %arg11: memref<2x180x128xf32, #tpu.memory_space<vmem>>, %arg12: memref<183x128xf32, #tpu.memory_space<vmem>>, %arg13: memref<2x!tpu.dma_semaphore, #tpu.memory_space<semaphore_mem>>) attributes {dimension_semantics = [#tpu.dimension_semantics<parallel>, #tpu.dimension_semantics<arbitrary>], iteration_bounds = array<i64: 2, 2>, scalar_prefetch = 0 : i64, scratch_operands = 3 : i64, tpu.core_type = #tpu.core_type<tc>, window_params = [{}, {pipeline_mode = #tpu.pipeline_mode<synchronous>, transform_indices = @transform_1, window_bounds = array<i64: 324, 1>}, {pipeline_mode = #tpu.pipeline_mode<synchronous>, transform_indices = @transform_2, window_bounds = array<i64: 128, 128>}, {pipeline_mode = #tpu.pipeline_mode<synchronous>, transform_indices = @transform_3, window_bounds = array<i64: 1, 128>}, {pipeline_mode = #tpu.pipeline_mode<synchronous>, transform_indices = @transform_4, window_bounds = array<i64: 9, 128>}, {pipeline_mode = #tpu.pipeline_mode<synchronous>, transform_indices = @transform_5, window_bounds = array<i64: 1, 128>}, {pipeline_mode = #tpu.pipeline_mode<synchronous>, transform_indices = @transform_6, window_bounds = array<i64: 128, 128>}, {pipeline_mode = #tpu.pipeline_mode<synchronous>, transform_indices = @transform_7, window_bounds = array<i64: 1, 128>}, {transform_indices = @transform_8, window_bounds = array<i64: 1, 144, 128>}]} {
    %c2_i32 = arith.constant 2 : i32
    %c0_i32 = arith.constant 0 : i32
    %0 = arith.cmpi eq, %c2_i32, %c0_i32 : i32
    %c1_i32 = arith.constant 1 : i32
    %1 = arith.select %0, %c1_i32, %c2_i32 : i32
    %2 = arith.remsi %arg1, %1 : i32
    %c0_i32_0 = arith.constant 0 : i32
    %3 = arith.cmpi ne, %2, %c0_i32_0 : i32
    %c0_i32_1 = arith.constant 0 : i32
    %4 = arith.cmpi slt, %2, %c0_i32_1 : i32
    %c0_i32_2 = arith.constant 0 : i32
    %5 = arith.cmpi slt, %1, %c0_i32_2 : i32
    %6 = arith.xori %4, %5 : i1
    %7 = arith.andi %6, %3 : i1
    %8 = arith.addi %2, %1 : i32
    %9 = arith.select %7, %8, %2 : i32
    %c0_i32_3 = arith.constant 0 : i32
    %10 = arith.cmpi eq, %arg1, %c0_i32_3 : i32
    %11 = arith.extui %10 : i1 to i32
    %c0_i32_4 = arith.constant 0 : i32
    %12 = arith.cmpi ne, %11, %c0_i32_4 : i32
    scf.if %12 {
      %c0_i32_52 = arith.constant 0 : i32
      %c0_i32_53 = arith.constant 0 : i32
      %c0_i32_54 = arith.constant 0 : i32
      %c0_i32_55 = arith.constant 0 : i32
      %112 = tpu.memref_slice %arg2[%arg0, %c0_i32_54, %c0_i32_55] : memref<2x324x128xf32, #tpu.memory_space<any>> -> memref<1x180x128xf32, #tpu.memory_space<any>>
      %113 = tpu.memref_squeeze %112 : memref<1x180x128xf32, #tpu.memory_space<any>> -> memref<180x128xf32, #tpu.memory_space<any>>
      %c0_i32_56 = arith.constant 0 : i32
      %c0_i32_57 = arith.constant 0 : i32
      %114 = tpu.memref_slice %arg11[%c0_i32_52, %c0_i32_56, %c0_i32_57] : memref<2x180x128xf32, #tpu.memory_space<vmem>> -> memref<1x180x128xf32, #tpu.memory_space<vmem>>
      %115 = tpu.memref_squeeze %114 : memref<1x180x128xf32, #tpu.memory_space<vmem>> -> memref<180x128xf32, #tpu.memory_space<vmem>>
      %116 = tpu.memref_slice %arg13[%c0_i32_53] : memref<2x!tpu.dma_semaphore, #tpu.memory_space<semaphore_mem>> -> memref<1x!tpu.dma_semaphore, #tpu.memory_space<semaphore_mem>>
      %117 = tpu.memref_squeeze %116 : memref<1x!tpu.dma_semaphore, #tpu.memory_space<semaphore_mem>> -> memref<!tpu.dma_semaphore, #tpu.memory_space<semaphore_mem>>
      tpu.enqueue_dma source(%113 : memref<180x128xf32, #tpu.memory_space<any>>) target(%115 : memref<180x128xf32, #tpu.memory_space<vmem>>) target_semaphore(%117 : memref<!tpu.dma_semaphore, #tpu.memory_space<semaphore_mem>>)
    } else {
    }
    %c1_i32_5 = arith.constant 1 : i32
    %13 = arith.addi %arg1, %c1_i32_5 : i32
    %c2_i32_6 = arith.constant 2 : i32
    %14 = arith.cmpi slt, %13, %c2_i32_6 : i32
    %15 = arith.extui %14 : i1 to i32
    %c0_i32_7 = arith.constant 0 : i32
    %16 = arith.cmpi ne, %15, %c0_i32_7 : i32
    scf.if %16 {
      %c1_i32_52 = arith.constant 1 : i32
      %112 = arith.addi %arg1, %c1_i32_52 : i32
      %c1_i32_53 = arith.constant 1 : i32
      %113 = arith.subi %c1_i32_53, %9 : i32
      %c144_i32_54 = arith.constant 144 : i32
      %114 = arith.muli %112, %c144_i32_54 : i32
      %c0_i32_55 = arith.constant 0 : i32
      %115 = tpu.memref_slice %arg2[%arg0, %114, %c0_i32_55] : memref<2x324x128xf32, #tpu.memory_space<any>> -> memref<1x180x128xf32, #tpu.memory_space<any>>
      %116 = tpu.memref_squeeze %115 : memref<1x180x128xf32, #tpu.memory_space<any>> -> memref<180x128xf32, #tpu.memory_space<any>>
      %c0_i32_56 = arith.constant 0 : i32
      %c0_i32_57 = arith.constant 0 : i32
      %117 = tpu.memref_slice %arg11[%113, %c0_i32_56, %c0_i32_57] : memref<2x180x128xf32, #tpu.memory_space<vmem>> -> memref<1x180x128xf32, #tpu.memory_space<vmem>>
      %118 = tpu.memref_squeeze %117 : memref<1x180x128xf32, #tpu.memory_space<vmem>> -> memref<180x128xf32, #tpu.memory_space<vmem>>
      %119 = tpu.memref_slice %arg13[%113] : memref<2x!tpu.dma_semaphore, #tpu.memory_space<semaphore_mem>> -> memref<1x!tpu.dma_semaphore, #tpu.memory_space<semaphore_mem>>
      %120 = tpu.memref_squeeze %119 : memref<1x!tpu.dma_semaphore, #tpu.memory_space<semaphore_mem>> -> memref<!tpu.dma_semaphore, #tpu.memory_space<semaphore_mem>>
      tpu.enqueue_dma source(%116 : memref<180x128xf32, #tpu.memory_space<any>>) target(%118 : memref<180x128xf32, #tpu.memory_space<vmem>>) target_semaphore(%120 : memref<!tpu.dma_semaphore, #tpu.memory_space<semaphore_mem>>)
    } else {
    }
    %c0_i32_8 = arith.constant 0 : i32
    %c0_i32_9 = arith.constant 0 : i32
    %17 = tpu.memref_slice %arg2[%arg0, %c0_i32_8, %c0_i32_9] : memref<2x324x128xf32, #tpu.memory_space<any>> -> memref<1x180x128xf32, #tpu.memory_space<any>>
    %18 = tpu.memref_squeeze %17 : memref<1x180x128xf32, #tpu.memory_space<any>> -> memref<180x128xf32, #tpu.memory_space<any>>
    %c0_i32_10 = arith.constant 0 : i32
    %c0_i32_11 = arith.constant 0 : i32
    %19 = tpu.memref_slice %arg11[%9, %c0_i32_10, %c0_i32_11] : memref<2x180x128xf32, #tpu.memory_space<vmem>> -> memref<1x180x128xf32, #tpu.memory_space<vmem>>
    %20 = tpu.memref_squeeze %19 : memref<1x180x128xf32, #tpu.memory_space<vmem>> -> memref<180x128xf32, #tpu.memory_space<vmem>>
    %21 = tpu.memref_slice %arg13[%9] : memref<2x!tpu.dma_semaphore, #tpu.memory_space<semaphore_mem>> -> memref<1x!tpu.dma_semaphore, #tpu.memory_space<semaphore_mem>>
    %22 = tpu.memref_squeeze %21 : memref<1x!tpu.dma_semaphore, #tpu.memory_space<semaphore_mem>> -> memref<!tpu.dma_semaphore, #tpu.memory_space<semaphore_mem>>
    tpu.wait_dma2 semaphore(%22 : memref<!tpu.dma_semaphore, #tpu.memory_space<semaphore_mem>>) src(%18 : memref<180x128xf32, #tpu.memory_space<any>>) dst(%20 : memref<180x128xf32, #tpu.memory_space<vmem>>)
    %c144_i32 = arith.constant 144 : i32
    %23 = arith.muli %arg1, %c144_i32 : i32
    %24 = tpu.assume_multiple %23, 144 : i32
    %25 = arith.index_cast %24 : i32 to index
    %c0 = arith.constant 0 : index
    %26 = vector.load %arg3[%25, %c0] : memref<324x1xf32, #tpu.memory_space<vmem>>, vector<180x1xf32>
    %27 = arith.index_cast %9 : i32 to index
    %c0_12 = arith.constant 0 : index
    %c0_13 = arith.constant 0 : index
    %28 = vector.load %arg11[%27, %c0_12, %c0_13] : memref<2x180x128xf32, #tpu.memory_space<vmem>>, vector<1x180x128xf32>
    %29 = vector.shape_cast %28 : vector<1x180x128xf32> to vector<180x128xf32>
    %c0_14 = arith.constant 0 : index
    %c0_15 = arith.constant 0 : index
    %30 = vector.load %arg4[%c0_14, %c0_15] : memref<128x128xf32, #tpu.memory_space<vmem>>, vector<128x128xf32>
    %cst = arith.constant dense<0.000000e+00> : vector<180x128xf32>
    %31 = tpu.matmul %29, %30, %cst {dimension_numbers = #tpu.dot_dimension_numbers<[1], [0], [0], [1], [0, 0, 1, 1], [], []>} : vector<180x128xf32>, vector<128x128xf32>, vector<180x128xf32> -> vector<180x128xf32>
    %c0_16 = arith.constant 0 : index
    %c0_17 = arith.constant 0 : index
    %32 = vector.load %arg5[%c0_16, %c0_17] : memref<1x128xf32, #tpu.memory_space<vmem>>, vector<1x128xf32>
    %33 = vector.broadcast %32 : vector<1x128xf32> to vector<180x128xf32>
    %34 = arith.addf %31, %33 : vector<180x128xf32>
    %cst_18 = arith.constant 0.000000e+00 : f32
    %cst_19 = arith.constant 6.000000e+00 : f32
    %35 = vector.broadcast %cst_18 : f32 to vector<180x128xf32>
    %36 = arith.maximumf %35, %34 : vector<180x128xf32>
    %37 = vector.broadcast %cst_19 : f32 to vector<180x128xf32>
    %38 = arith.minimumf %37, %36 : vector<180x128xf32>
    %39 = vector.broadcast %26 : vector<180x1xf32> to vector<180x128xf32>
    %40 = arith.mulf %38, %39 : vector<180x128xf32>
    %c0_20 = arith.constant 0 : index
    %c0_21 = arith.constant 0 : index
    %41 = vector.load %arg12[%c0_20, %c0_21] : memref<183x128xf32, #tpu.memory_space<vmem>>, vector<180x128xf32>
    tpu.vector_store %arg12[%c0_20, %c0_21], %40 {strides = array<i32>} : memref<183x128xf32, #tpu.memory_space<vmem>>, vector<180x128xf32>,
    %cst_22 = arith.constant 0.000000e+00 : f32
    %42 = vector.broadcast %cst_22 : f32 to vector<3x128xf32>
    %c180 = arith.constant 180 : index
    %c0_23 = arith.constant 0 : index
    %43 = vector.load %arg12[%c180, %c0_23] : memref<183x128xf32, #tpu.memory_space<vmem>>, vector<3x128xf32>
    tpu.vector_store %arg12[%c180, %c0_23], %42 {strides = array<i32>} : memref<183x128xf32, #tpu.memory_space<vmem>>, vector<3x128xf32>,
    %c0_24 = arith.constant 0 : index
    %c0_25 = arith.constant 0 : index
    %44 = vector.load %arg6[%c0_24, %c0_25] : memref<9x128xf32, #tpu.memory_space<vmem>>, vector<9x128xf32>
    %c0_26 = arith.constant 0 : index
    %c0_27 = arith.constant 0 : index
    %45 = vector.load %arg7[%c0_26, %c0_27] : memref<1x128xf32, #tpu.memory_space<vmem>>, vector<1x128xf32>
    %cst_28 = arith.constant 0.000000e+00 : f32
    %46 = vector.broadcast %cst_28 : f32 to vector<144x128xf32>
    %cst_29 = arith.constant 0.000000e+00 : f32
    %47 = vector.broadcast %cst_29 : f32 to vector<144x128xf32>
    %c0_30 = arith.constant 0 : index
    %c0_31 = arith.constant 0 : index
    %48 = vector.load %arg12[%c0_30, %c0_31] : memref<183x128xf32, #tpu.memory_space<vmem>>, vector<144x128xf32>
    %49 = vector.extract_strided_slice %44 {offsets = [0, 0], sizes = [1, 128], strides = [1, 1]} : vector<9x128xf32> to vector<1x128xf32>
    %50 = vector.broadcast %49 : vector<1x128xf32> to vector<144x128xf32>
    %51 = arith.mulf %48, %50 : vector<144x128xf32>
    %52 = arith.addf %47, %51 : vector<144x128xf32>
    %c1 = arith.constant 1 : index
    %c0_32 = arith.constant 0 : index
    %53 = vector.load %arg12[%c1, %c0_32] : memref<183x128xf32, #tpu.memory_space<vmem>>, vector<144x128xf32>
    %54 = vector.extract_strided_slice %44 {offsets = [1, 0], sizes = [1, 128], strides = [1, 1]} : vector<9x128xf32> to vector<1x128xf32>
    %55 = vector.broadcast %54 : vector<1x128xf32> to vector<144x128xf32>
    %56 = arith.mulf %53, %55 : vector<144x128xf32>
    %57 = arith.addf %52, %56 : vector<144x128xf32>
    %c2 = arith.constant 2 : index
    %c0_33 = arith.constant 0 : index
    %58 = vector.load %arg12[%c2, %c0_33] : memref<183x128xf32, #tpu.memory_space<vmem>>, vector<144x128xf32>
    %59 = vector.extract_strided_slice %44 {offsets = [2, 0], sizes = [1, 128], strides = [1, 1]} : vector<9x128xf32> to vector<1x128xf32>
    %60 = vector.broadcast %59 : vector<1x128xf32> to vector<144x128xf32>
    %61 = arith.mulf %58, %60 : vector<144x128xf32>
    %62 = arith.addf %57, %61 : vector<144x128xf32>
    %c18 = arith.constant 18 : index
    %c0_34 = arith.constant 0 : index
    %63 = vector.load %arg12[%c18, %c0_34] : memref<183x128xf32, #tpu.memory_space<vmem>>, vector<144x128xf32>
    %64 = vector.extract_strided_slice %44 {offsets = [3, 0], sizes = [1, 128], strides = [1, 1]} : vector<9x128xf32> to vector<1x128xf32>
    %65 = vector.broadcast %64 : vector<1x128xf32> to vector<144x128xf32>
    %66 = arith.mulf %63, %65 : vector<144x128xf32>
    %67 = arith.addf %62, %66 : vector<144x128xf32>
    %c19 = arith.constant 19 : index
    %c0_35 = arith.constant 0 : index
    %68 = vector.load %arg12[%c19, %c0_35] : memref<183x128xf32, #tpu.memory_space<vmem>>, vector<144x128xf32>
    %69 = vector.extract_strided_slice %44 {offsets = [4, 0], sizes = [1, 128], strides = [1, 1]} : vector<9x128xf32> to vector<1x128xf32>
    %70 = vector.broadcast %69 : vector<1x128xf32> to vector<144x128xf32>
    %71 = arith.mulf %68, %70 : vector<144x128xf32>
    %72 = arith.addf %67, %71 : vector<144x128xf32>
    %c20 = arith.constant 20 : index
    %c0_36 = arith.constant 0 : index
    %73 = vector.load %arg12[%c20, %c0_36] : memref<183x128xf32, #tpu.memory_space<vmem>>, vector<144x128xf32>
    %74 = vector.extract_strided_slice %44 {offsets = [5, 0], sizes = [1, 128], strides = [1, 1]} : vector<9x128xf32> to vector<1x128xf32>
    %75 = vector.broadcast %74 : vector<1x128xf32> to vector<144x128xf32>
    %76 = arith.mulf %73, %75 : vector<144x128xf32>
    %77 = arith.addf %72, %76 : vector<144x128xf32>
    %c36 = arith.constant 36 : index
    %c0_37 = arith.constant 0 : index
    %78 = vector.load %arg12[%c36, %c0_37] : memref<183x128xf32, #tpu.memory_space<vmem>>, vector<144x128xf32>
    %79 = vector.extract_strided_slice %44 {offsets = [6, 0], sizes = [1, 128], strides = [1, 1]} : vector<9x128xf32> to vector<1x128xf32>
    %80 = vector.broadcast %79 : vector<1x128xf32> to vector<144x128xf32>
    %81 = arith.mulf %78, %80 : vector<144x128xf32>
    %82 = arith.addf %77, %81 : vector<144x128xf32>
    %c37 = arith.constant 37 : index
    %c0_38 = arith.constant 0 : index
    %83 = vector.load %arg12[%c37, %c0_38] : memref<183x128xf32, #tpu.memory_space<vmem>>, vector<144x128xf32>
    %84 = vector.extract_strided_slice %44 {offsets = [7, 0], sizes = [1, 128], strides = [1, 1]} : vector<9x128xf32> to vector<1x128xf32>
    %85 = vector.broadcast %84 : vector<1x128xf32> to vector<144x128xf32>
    %86 = arith.mulf %83, %85 : vector<144x128xf32>
    %87 = arith.addf %82, %86 : vector<144x128xf32>
    %c38 = arith.constant 38 : index
    %c0_39 = arith.constant 0 : index
    %88 = vector.load %arg12[%c38, %c0_39] : memref<183x128xf32, #tpu.memory_space<vmem>>, vector<144x128xf32>
    %89 = vector.extract_strided_slice %44 {offsets = [8, 0], sizes = [1, 128], strides = [1, 1]} : vector<9x128xf32> to vector<1x128xf32>
    %90 = vector.broadcast %89 : vector<1x128xf32> to vector<144x128xf32>
    %91 = arith.mulf %88, %90 : vector<144x128xf32>
    %92 = arith.addf %87, %91 : vector<144x128xf32>
    %93 = vector.broadcast %45 : vector<1x128xf32> to vector<144x128xf32>
    %94 = arith.addf %92, %93 : vector<144x128xf32>
    %cst_40 = arith.constant 0.000000e+00 : f32
    %cst_41 = arith.constant 6.000000e+00 : f32
    %95 = vector.broadcast %cst_40 : f32 to vector<144x128xf32>
    %96 = arith.maximumf %95, %94 : vector<144x128xf32>
    %97 = vector.broadcast %cst_41 : f32 to vector<144x128xf32>
    %98 = arith.minimumf %97, %96 : vector<144x128xf32>
    %c0_42 = arith.constant 0 : index
    %c0_43 = arith.constant 0 : index
    %99 = vector.load %arg8[%c0_42, %c0_43] : memref<128x128xf32, #tpu.memory_space<vmem>>, vector<128x128xf32>
    %cst_44 = arith.constant dense<0.000000e+00> : vector<144x128xf32>
    %100 = tpu.matmul %98, %99, %cst_44 {dimension_numbers = #tpu.dot_dimension_numbers<[1], [0], [0], [1], [0, 0, 1, 1], [], []>} : vector<144x128xf32>, vector<128x128xf32>, vector<144x128xf32> -> vector<144x128xf32>
    %101 = arith.addf %46, %100 : vector<144x128xf32>
    %c0_45 = arith.constant 0 : index
    %c0_46 = arith.constant 0 : index
    %102 = vector.load %arg9[%c0_45, %c0_46] : memref<1x128xf32, #tpu.memory_space<vmem>>, vector<1x128xf32>
    %103 = vector.broadcast %102 : vector<1x128xf32> to vector<144x128xf32>
    %104 = arith.addf %101, %103 : vector<144x128xf32>
    %105 = arith.index_cast %9 : i32 to index
    %c19_47 = arith.constant 19 : index
    %c0_48 = arith.constant 0 : index
    %106 = vector.load %arg11[%105, %c19_47, %c0_48] : memref<2x180x128xf32, #tpu.memory_space<vmem>>, vector<1x144x128xf32>
    %107 = vector.shape_cast %106 : vector<1x144x128xf32> to vector<144x128xf32>
    %108 = arith.addf %104, %107 : vector<144x128xf32>
    %c0_49 = arith.constant 0 : index
    %c0_50 = arith.constant 0 : index
    %c0_51 = arith.constant 0 : index
    %109 = vector.load %arg10[%c0_49, %c0_50, %c0_51] : memref<1x144x128xf32, #tpu.memory_space<vmem>>, vector<1x144x128xf32>
    %110 = vector.shape_cast %109 : vector<1x144x128xf32> to vector<144x128xf32>
    %111 = vector.shape_cast %108 : vector<144x128xf32> to vector<1x144x128xf32>
    tpu.vector_store %arg10[%c0_49, %c0_50, %c0_51], %111 {strides = array<i32>} : memref<1x144x128xf32, #tpu.memory_space<vmem>>, vector<1x144x128xf32>,
    return
  }
  func.func @transform_1(%arg0: i32, %arg1: i32) -> (i32, i32) {
    %c0_i32 = arith.constant 0 : i32
    %c0_i32_0 = arith.constant 0 : i32
    %c0_i32_1 = arith.constant 0 : i32
    return %c0_i32, %c0_i32_0 : i32, i32
  }
  func.func @transform_2(%arg0: i32, %arg1: i32) -> (i32, i32) {
    %c0_i32 = arith.constant 0 : i32
    %c0_i32_0 = arith.constant 0 : i32
    %c0_i32_1 = arith.constant 0 : i32
    return %c0_i32, %c0_i32_0 : i32, i32
  }
  func.func @transform_3(%arg0: i32, %arg1: i32) -> (i32, i32) {
    %c0_i32 = arith.constant 0 : i32
    %c0_i32_0 = arith.constant 0 : i32
    %c0_i32_1 = arith.constant 0 : i32
    return %c0_i32, %c0_i32_0 : i32, i32
  }
  func.func @transform_4(%arg0: i32, %arg1: i32) -> (i32, i32) {
    %c0_i32 = arith.constant 0 : i32
    %c0_i32_0 = arith.constant 0 : i32
    %c0_i32_1 = arith.constant 0 : i32
    return %c0_i32, %c0_i32_0 : i32, i32
  }
  func.func @transform_5(%arg0: i32, %arg1: i32) -> (i32, i32) {
    %c0_i32 = arith.constant 0 : i32
    %c0_i32_0 = arith.constant 0 : i32
    %c0_i32_1 = arith.constant 0 : i32
    return %c0_i32, %c0_i32_0 : i32, i32
  }
  func.func @transform_6(%arg0: i32, %arg1: i32) -> (i32, i32) {
    %c0_i32 = arith.constant 0 : i32
    %c0_i32_0 = arith.constant 0 : i32
    %c0_i32_1 = arith.constant 0 : i32
    return %c0_i32, %c0_i32_0 : i32, i32
  }
  func.func @transform_7(%arg0: i32, %arg1: i32) -> (i32, i32) {
    %c0_i32 = arith.constant 0 : i32
    %c0_i32_0 = arith.constant 0 : i32
    %c0_i32_1 = arith.constant 0 : i32
    return %c0_i32, %c0_i32_0 : i32, i32
  }
  func.func @transform_8(%arg0: i32, %arg1: i32) -> (i32, i32, i32) {
    %c0_i32 = arith.constant 0 : i32
    %c0_i32_0 = arith.constant 0 : i32
    return %arg0, %arg1, %c0_i32 : i32, i32, i32
  }
}

</mosaic_0001>

<llo_original>
// kernel: tpu_custom_call.1
$region0: #{tpu_custom_call.1}
  #allocation0 [shape = 'u32[]', space=smem, size = 0x4, offset = 0x4, fixed_abs, tag = 'smem constant byte address 0x4 - core index']
  #allocation1 [shape = 'u32[144,128]{1,0:T(1,128)}', space=vmem, size = 0x12000, scoped, tag = 'internal scratch']
  #allocation2 [shape = 'f32[2,180,128]{2,1,0:T(8,128)}', space=vmem, size = 0x2e000, scoped, tag = 'scratch operand']
  #allocation3 [shape = 'f32[183,128]{1,0:T(8,128)}', space=vmem, size = 0x17000, scoped, tag = 'scratch operand']
  #allocation4 [shape = 's32[2]{0}', space=sflag, size = 0x8, scoped, tag = 'scratch operand']
  #allocation7 [shape = 's32[]', space=sflag, size = 0x4, offset = 0, fixed_abs, tag = 'sflag constant byte address 0x0 - dummy sync flag']
  #allocation8 [shape = 's32[]', space=sflag, size = 0x4, offset = 0, fixed_abs, tag = 'sflag constant byte address 0x0 - dummy sync flag']
  %s0 = inlined_call_operand.vmem [shape: f32[2,324,128], index: 0, kind: input, shape index: {}]
  %s1 = inlined_call_operand.vmem [shape: f32[324,1], index: 1, kind: input, shape index: {}]
  %s2 = inlined_call_operand.vmem [shape: f32[128,128], index: 2, kind: input, shape index: {}]
  %s3 = inlined_call_operand.vmem [shape: f32[1,128], index: 3, kind: input, shape index: {}]
  %s4 = inlined_call_operand.vmem [shape: f32[9,128], index: 4, kind: input, shape index: {}]
  %s5 = inlined_call_operand.vmem [shape: f32[1,128], index: 5, kind: input, shape index: {}]
  %s6 = inlined_call_operand.vmem [shape: f32[128,128], index: 6, kind: input, shape index: {}]
  %s7 = inlined_call_operand.vmem [shape: f32[1,128], index: 7, kind: input, shape index: {}]
  %s8 = inlined_call_operand.hbm [shape: f32[2,288,128], index: 8, kind: output, shape index: {}]
  %s9 = sld [smem:[#allocation0]]
  $region143: #{tpu_custom_call.1} parent=0
    _
  %s11 = ssub.s32 1, %s9
  %s12 = scalar_select 0, %s11, %s9
  $region1: #{tpu_custom_call.1} parent=0
    #allocation5 [shape = 'u8[147456]{0}', space=vmem, size = 0x24000, scoped, tag = 'output window, operand 0']
    #allocation6 [shape = 's32[2]{0}', space=sflag, size = 0x8, scoped, tag = 'scoped memory for tpu_custom_call.1']
    %13 = vsyncpa [#allocation6], 0
    %s14 = scalar_lea.sflag [#allocation6], 1
    %15 = vsyncpa %s14, 0
    loop: start=0, step=1, limit=6
    $region2: #{tpu_custom_call.1} parent=1 // loop_pre_header
      _
    $region3: #{tpu_custom_call.1} parent=1 // loop_header
      %s17 = sphi 0, %s21
      %p18 = scmp.ge.s32.totalorder %s17, 6
      %s24 = sphi 0, %s36
      %s25 = sphi 0, %s32
      %s26 = sphi 0, %s24
      %s27 = sphi 0, %s25
      %s28 = sphi 0, %s26
      %s29 = sphi 0, %s27
      %s37 = sphi 0, %s37
      %s39 = sphi 0, %s37
      %s40 = sphi 0, %s39
      %s54 = sphi 0, %s40
      %s58 = sphi 0, %s58
      %s60 = sphi 0, %s58
      %s61 = sphi 0, %s60
      %s75 = sphi 0, %s61
      %s79 = sphi 0, %s79
      %s81 = sphi 0, %s79
      %s82 = sphi 0, %s81
      %s96 = sphi 0, %s82
      %s100 = sphi 0, %s100
      %s102 = sphi 0, %s100
      %s103 = sphi 0, %s102
      %s117 = sphi 0, %s103
      %s121 = sphi 0, %s121
      %s123 = sphi 0, %s121
      %s124 = sphi 0, %s123
      %s138 = sphi 0, %s124
      %s142 = sphi 0, %s142
      %s144 = sphi 0, %s142
      %s145 = sphi 0, %s144
      %s159 = sphi 0, %s145
      %s163 = sphi 0, %s163
      %s165 = sphi 0, %s163
      %s166 = sphi 0, %s165
      %s180 = sphi 0, %s166
      %s188 = sphi 0, %s190
      %s191 = sphi 0, %s188
      %s192 = sphi 0, %s191
      %s208 = sphi 0, %s192
    $region4: #{tpu_custom_call.1} parent=1 // loop_header_branch
      %20 = sbr.rel (%p18) target = $region8
    $region5: #{tpu_custom_call.1} parent=1 // loop_body
      %s22 = ssub.s32 %s17, 1
      %s23 = ssub.s32 %s17, 2
      %s30 = sadd.s32 1, %s25
      %p31 = scmp.ge.s32.totalorder %s30, 2
      %s32 = scalar_select %p31, 0, %s30
      %s33 = sadd.s32 1, %s24
      %s34 = scalar_select %p31, %s33, %s24
      %p35 = scmp.ge.s32.totalorder %s34, 2
      %s36 = scalar_select %p35, 0, %s34
      %s38 = sadd.s32 %s37, 1
      %p41 = scmp.eq.s32.totalorder %s17, 3
      %p42 = scmp.ne.s32.totalorder %s37, %s39
      %p43 = scmp.eq.s32.totalorder %s17, 0
      %p44 = por %p42, %p43
      %p45 = scmp.ne.s32.totalorder %s37, %s39
      %p46 = scmp.eq.s32.totalorder %s22, 3
      %p47 = por %p45, %p46
      %p48 = scmp.ne.s32.totalorder %s39, %s40
      %p49 = scmp.eq.s32.totalorder %s22, 0
      %p50 = por %p48, %p49
      %p51 = scmp.ne.s32.totalorder %s39, %s40
      %p52 = scmp.eq.s32.totalorder %s23, 3
      %p53 = por %p51, %p52
      %p55 = scmp.ne.s32.totalorder %s40, %s54
      %p56 = scmp.eq.s32.totalorder %s23, 0
      %p57 = por %p55, %p56
      %s59 = sadd.s32 %s58, 1
      %p62 = scmp.eq.s32.totalorder %s17, 3
      %p63 = scmp.ne.s32.totalorder %s58, %s60
      %p64 = scmp.eq.s32.totalorder %s17, 0
      %p65 = por %p63, %p64
      %p66 = scmp.ne.s32.totalorder %s58, %s60
      %p67 = scmp.eq.s32.totalorder %s22, 3
      %p68 = por %p66, %p67
      %p69 = scmp.ne.s32.totalorder %s60, %s61
      %p70 = scmp.eq.s32.totalorder %s22, 0
      %p71 = por %p69, %p70
      %p72 = scmp.ne.s32.totalorder %s60, %s61
      %p73 = scmp.eq.s32.totalorder %s23, 3
      %p74 = por %p72, %p73
      %p76 = scmp.ne.s32.totalorder %s61, %s75
      %p77 = scmp.eq.s32.totalorder %s23, 0
      %p78 = por %p76, %p77
      %s80 = sadd.s32 %s79, 1
      %p83 = scmp.eq.s32.totalorder %s17, 3
      %p84 = scmp.ne.s32.totalorder %s79, %s81
      %p85 = scmp.eq.s32.totalorder %s17, 0
      %p86 = por %p84, %p85
      %p87 = scmp.ne.s32.totalorder %s79, %s81
      %p88 = scmp.eq.s32.totalorder %s22, 3
      %p89 = por %p87, %p88
      %p90 = scmp.ne.s32.totalorder %s81, %s82
      %p91 = scmp.eq.s32.totalorder %s22, 0
      %p92 = por %p90, %p91
      %p93 = scmp.ne.s32.totalorder %s81, %s82
      %p94 = scmp.eq.s32.totalorder %s23, 3
      %p95 = por %p93, %p94
      %p97 = scmp.ne.s32.totalorder %s82, %s96
      %p98 = scmp.eq.s32.totalorder %s23, 0
      %p99 = por %p97, %p98
      %s101 = sadd.s32 %s100, 1
      %p104 = scmp.eq.s32.totalorder %s17, 3
      %p105 = scmp.ne.s32.totalorder %s100, %s102
      %p106 = scmp.eq.s32.totalorder %s17, 0
      %p107 = por %p105, %p106
      %p108 = scmp.ne.s32.totalorder %s100, %s102
      %p109 = scmp.eq.s32.totalorder %s22, 3
      %p110 = por %p108, %p109
      %p111 = scmp.ne.s32.totalorder %s102, %s103
      %p112 = scmp.eq.s32.totalorder %s22, 0
      %p113 = por %p111, %p112
      %p114 = scmp.ne.s32.totalorder %s102, %s103
      %p115 = scmp.eq.s32.totalorder %s23, 3
      %p116 = por %p114, %p115
      %p118 = scmp.ne.s32.totalorder %s103, %s117
      %p119 = scmp.eq.s32.totalorder %s23, 0
      %p120 = por %p118, %p119
      %s122 = sadd.s32 %s121, 1
      %p125 = scmp.eq.s32.totalorder %s17, 3
      %p126 = scmp.ne.s32.totalorder %s121, %s123
      %p127 = scmp.eq.s32.totalorder %s17, 0
      %p128 = por %p126, %p127
      %p129 = scmp.ne.s32.totalorder %s121, %s123
      %p130 = scmp.eq.s32.totalorder %s22, 3
      %p131 = por %p129, %p130
      %p132 = scmp.ne.s32.totalorder %s123, %s124
      %p133 = scmp.eq.s32.totalorder %s22, 0
      %p134 = por %p132, %p133
      %p135 = scmp.ne.s32.totalorder %s123, %s124
      %p136 = scmp.eq.s32.totalorder %s23, 3
      %p137 = por %p135, %p136
      %p139 = scmp.ne.s32.totalorder %s124, %s138
      %p140 = scmp.eq.s32.totalorder %s23, 0
      %p141 = por %p139, %p140
      %s143 = sadd.s32 %s142, 1
      %p146 = scmp.eq.s32.totalorder %s17, 3
      %p147 = scmp.ne.s32.totalorder %s142, %s144
      %p148 = scmp.eq.s32.totalorder %s17, 0
      %p149 = por %p147, %p148
      %p150 = scmp.ne.s32.totalorder %s142, %s144
      %p151 = scmp.eq.s32.totalorder %s22, 3
      %p152 = por %p150, %p151
      %p153 = scmp.ne.s32.totalorder %s144, %s145
      %p154 = scmp.eq.s32.totalorder %s22, 0
      %p155 = por %p153, %p154
      %p156 = scmp.ne.s32.totalorder %s144, %s145
      %p157 = scmp.eq.s32.totalorder %s23, 3
      %p158 = por %p156, %p157
      %p160 = scmp.ne.s32.totalorder %s145, %s159
      %p161 = scmp.eq.s32.totalorder %s23, 0
      %p162 = por %p160, %p161
      %s164 = sadd.s32 %s163, 1
      %p167 = scmp.eq.s32.totalorder %s17, 3
      %p168 = scmp.ne.s32.totalorder %s163, %s165
      %p169 = scmp.eq.s32.totalorder %s17, 0
      %p170 = por %p168, %p169
      %p171 = scmp.ne.s32.totalorder %s163, %s165
      %p172 = scmp.eq.s32.totalorder %s22, 3
      %p173 = por %p171, %p172
      %p174 = scmp.ne.s32.totalorder %s165, %s166
      %p175 = scmp.eq.s32.totalorder %s22, 0
      %p176 = por %p174, %p175
      %p177 = scmp.ne.s32.totalorder %s165, %s166
      %p178 = scmp.eq.s32.totalorder %s23, 3
      %p179 = por %p177, %p178
      %p181 = scmp.ne.s32.totalorder %s166, %s180
      %p182 = scmp.eq.s32.totalorder %s23, 0
      %p183 = por %p181, %p182
      %s184 = ssub.s32 %s24, %s36
      %s185 = ssub.s32 %s25, %s32
      %s186 = sor.u32 %s184, %s185
      %p187 = scmp.eq.s32.totalorder %s186, 0
      %s189 = sadd.s32 %s188, 1
      %s190 = scalar_select %p187, %s188, %s189
      %p193 = pneg %p187
      %p194 = scmp.eq.s32.totalorder %s17, 3
      %p195 = por %p193, %p194
      %p196 = scmp.ne.s32.totalorder %s188, %s191
      %p197 = scmp.eq.s32.totalorder %s17, 0
      %p198 = por %p196, %p197
      %p199 = scmp.ne.s32.totalorder %s188, %s191
      %p200 = scmp.eq.s32.totalorder %s22, 3
      %p201 = por %p199, %p200
      %p202 = scmp.ne.s32.totalorder %s191, %s192
      %p203 = scmp.eq.s32.totalorder %s22, 0
      %p204 = por %p202, %p203
      %p205 = scmp.ne.s32.totalorder %s191, %s192
      %p206 = scmp.eq.s32.totalorder %s23, 3
      %p207 = por %p205, %p206
      %p209 = scmp.ne.s32.totalorder %s192, %s208
      %p210 = scmp.eq.s32.totalorder %s23, 0
      %p211 = por %p209, %p210
      %p212 = scmp.le.s32.totalorder 1, %s17
      %p213 = scmp.lt.s32.totalorder %s17, 5
      %p214 = pnand %p212, %p213
      %p215 = pneg %p214
      // Predicated region
      $region9: #{tpu_custom_call.1} parent=5 // pred_check
        _
      $region10: #{tpu_custom_call.1} parent=5 // pred_check_branch
        %217 = sbr.rel (%p214) target = $region12
      $region11: #{tpu_custom_call.1} parent=5 // pred_region
        %s218 = ssub.s32 %s17, 1
        // Predicated region
        $region13: #{tpu_custom_call.1} parent=11 // pred_check
          %p219 = pneg %p50
        $region14: #{tpu_custom_call.1} parent=11 // pred_check_branch
          %221 = sbr.rel (%p219) target = $region16
        $region15: #{tpu_custom_call.1} parent=11 // pred_region
          _
        $region16: #{tpu_custom_call.1} parent=11 // pred_fallthru
          _
        // Predicated region
        $region17: #{tpu_custom_call.1} parent=11 // pred_check
          %p222 = pneg %p71
        $region18: #{tpu_custom_call.1} parent=11 // pred_check_branch
          %224 = sbr.rel (%p222) target = $region20
        $region19: #{tpu_custom_call.1} parent=11 // pred_region
          _
        $region20: #{tpu_custom_call.1} parent=11 // pred_fallthru
          _
        // Predicated region
        $region21: #{tpu_custom_call.1} parent=11 // pred_check
          %p225 = pneg %p92
        $region22: #{tpu_custom_call.1} parent=11 // pred_check_branch
          %227 = sbr.rel (%p225) target = $region24
        $region23: #{tpu_custom_call.1} parent=11 // pred_region
          _
        $region24: #{tpu_custom_call.1} parent=11 // pred_fallthru
          _
        // Predicated region
        $region25: #{tpu_custom_call.1} parent=11 // pred_check
          %p228 = pneg %p113
        $region26: #{tpu_custom_call.1} parent=11 // pred_check_branch
          %230 = sbr.rel (%p228) target = $region28
        $region27: #{tpu_custom_call.1} parent=11 // pred_region
          _
        $region28: #{tpu_custom_call.1} parent=11 // pred_fallthru
          _
        // Predicated region
        $region29: #{tpu_custom_call.1} parent=11 // pred_check
          %p231 = pneg %p134
        $region30: #{tpu_custom_call.1} parent=11 // pred_check_branch
          %233 = sbr.rel (%p231) target = $region32
        $region31: #{tpu_custom_call.1} parent=11 // pred_region
          _
        $region32: #{tpu_custom_call.1} parent=11 // pred_fallthru
          _
        // Predicated region
        $region33: #{tpu_custom_call.1} parent=11 // pred_check
          %p234 = pneg %p155
        $region34: #{tpu_custom_call.1} parent=11 // pred_check_branch
          %236 = sbr.rel (%p234) target = $region36
        $region35: #{tpu_custom_call.1} parent=11 // pred_region
          _
        $region36: #{tpu_custom_call.1} parent=11 // pred_fallthru
          _
        // Predicated region
        $region37: #{tpu_custom_call.1} parent=11 // pred_check
          %p237 = pneg %p176
        $region38: #{tpu_custom_call.1} parent=11 // pred_check_branch
          %239 = sbr.rel (%p237) target = $region40
        $region39: #{tpu_custom_call.1} parent=11 // pred_region
          _
        $region40: #{tpu_custom_call.1} parent=11 // pred_fallthru
          _
      $region12: #{tpu_custom_call.1} parent=5 // pred_fallthru
        _
      %p240 = scmp.lt.s32.totalorder %s17, 4
      // Predicated region
      $region41: #{tpu_custom_call.1} parent=5 // pred_check
        %p241 = pneg %p240
      $region42: #{tpu_custom_call.1} parent=5 // pred_check_branch
        %243 = sbr.rel (%p241) target = $region44
      $region43: #{tpu_custom_call.1} parent=5 // pred_region
        _
      $region44: #{tpu_custom_call.1} parent=5 // pred_fallthru
        _
      %p244 = scmp.le.s32.totalorder 1, %s17
      %p245 = scmp.lt.s32.totalorder %s17, 5
      %p246 = pnand %p244, %p245
      %p247 = pneg %p246
      // Predicated region
      $region45: #{tpu_custom_call.1} parent=5 // pred_check
        _
      $region46: #{tpu_custom_call.1} parent=5 // pred_check_branch
        %249 = sbr.rel (%p246) target = $region48
      $region47: #{tpu_custom_call.1} parent=5 // pred_region
        %s250 = ssub.s32 %s17, 1
        %p251 = pneg %p50
        %p252 = pneg %p47
        %p253 = pneg %p71
        %p254 = pneg %p68
        %p255 = pneg %p92
        %p256 = pneg %p89
        %p257 = pneg %p113
        %p258 = pneg %p110
        %p259 = pneg %p134
        %p260 = pneg %p131
        %p261 = pneg %p155
        %p262 = pneg %p152
        %p263 = pneg %p176
        %p264 = pneg %p173
        %p265 = pneg %p204
        %p266 = pneg %p201
        %s267 = sand.u32 %s191, 1
        %s268 = scalar_lea.sflag [#allocation6], %s267
        %s269 = sand.u32 %s191, 1
        %s270 = smul.addr %s269, 144
        %s271 = scalar_lea.vmem [#allocation5], %s270
        %s272 = smul.u32 18, %s27
        %p273 = scmp.lt.s32.totalorder %s27, 0
        %s274 = ssub.s32 0, %s27
        %s275 = scalar_select %p273, %s274, %s27
        %s276 = sand.u32 %s275, 1
        %s277 = ssub.s32 0, %s276
        %s278 = scalar_select %p273, %s277, %s276
        %p279 = scmp.ne.s32.totalorder %s278, 0
        %p280 = scmp.lt.s32.totalorder %s278, 0
        %p281 = pnand %p280, %p279
        %p282 = pneg %p281
        %s283 = sadd.s32 %s278, 2
        %s284 = scalar_select %p282, %s283, %s278
        %p285 = scmp.eq.s32.totalorder %s27, 0
        // Predicated region
        $region49: #{tpu_custom_call.1} parent=47 // pred_check
          %p286 = pneg %p285
        $region50: #{tpu_custom_call.1} parent=47 // pred_check_branch
          %288 = sbr.rel (%p286) target = $region52
        $region51: #{tpu_custom_call.1} parent=47 // pred_region
          %s289 = smul.u32 %s26, 328
          %s290 = scalar_lea.vmem %s0, %s289
          %p292 = scmp.lt.u32.totalorder 180, 8
          %p293 = pneg %p292
          // Predicated region
          $region53: #{tpu_custom_call.1} parent=51 // pred_check
            _
          $region54: #{tpu_custom_call.1} parent=51 // pred_check_branch
            %295 = sbr.rel (%p292) target = $region56
          $region55: #{tpu_custom_call.1} parent=51 // pred_region
            %s310 = sand.u32 180, 7
            %p311 = scmp.eq.s32.totalorder %s310, 0
            %p312 = pneg %p311
            // Predicated region
            $region68: #{tpu_custom_call.1} parent=55 // pred_check
              _
            $region69: #{tpu_custom_call.1} parent=55 // pred_check_branch
              %314 = sbr.rel (%p311) target = $region71
            $region70: #{tpu_custom_call.1} parent=55 // pred_region
              %s315 = sand.u32 180, 7
              %s316 = ssub.s32 180, %s315
              %s317 = scalar_lea.vmem %s290, %s316
              %s318 = ssub.s32 180, %s315
              %s319 = scalar_lea.vmem [#allocation2], %s318
              loop: start=0, step=1, limit=1
              $region72: #{tpu_custom_call.1} parent=70 // loop_pre_header
                _
              $region73: #{tpu_custom_call.1} parent=70 // loop_header
                %s321 = sphi 0, %s325
                %p322 = scmp.ge.s32.totalorder %s321, 1
                %s326 = sphi %s290, %s290
                %s327 = sphi [#allocation2], [#allocation2]
              $region74: #{tpu_custom_call.1} parent=70 // loop_header_branch
                %324 = sbr.rel (%p322) target = $region78
              $region75: #{tpu_custom_call.1} parent=70 // loop_body
                %v328 = vld [vmem:[%s326] sm:$0xff]
                %329 = vst [vmem:[%s327] sm:$0xff] %v328
                %v330 = vld [vmem:[%s326 + $0x8] sm:$0xff]
                %331 = vst [vmem:[%s327 + $0x8] sm:$0xff] %v330
                %v332 = vld [vmem:[%s326 + $0x10] sm:$0xff]
                %333 = vst [vmem:[%s327 + $0x10] sm:$0xff] %v332
                %v334 = vld [vmem:[%s326 + $0x18] sm:$0xff]
                %335 = vst [vmem:[%s327 + $0x18] sm:$0xff] %v334
                %v336 = vld [vmem:[%s326 + $0x20] sm:$0xff]
                %337 = vst [vmem:[%s327 + $0x20] sm:$0xff] %v336
                %v338 = vld [vmem:[%s326 + $0x28] sm:$0xff]
                %339 = vst [vmem:[%s327 + $0x28] sm:$0xff] %v338
                %v340 = vld [vmem:[%s326 + $0x30] sm:$0xff]
                %341 = vst [vmem:[%s327 + $0x30] sm:$0xff] %v340
                %v342 = vld [vmem:[%s326 + $0x38] sm:$0xff]
                %343 = vst [vmem:[%s327 + $0x38] sm:$0xff] %v342
                %v344 = vld [vmem:[%s326 + $0x40] sm:$0xff]
                %345 = vst [vmem:[%s327 + $0x40] sm:$0xff] %v344
                %v346 = vld [vmem:[%s326 + $0x48] sm:$0xff]
                %347 = vst [vmem:[%s327 + $0x48] sm:$0xff] %v346
                %v348 = vld [vmem:[%s326 + $0x50] sm:$0xff]
                %349 = vst [vmem:[%s327 + $0x50] sm:$0xff] %v348
                %v350 = vld [vmem:[%s326 + $0x58] sm:$0xff]
                %351 = vst [vmem:[%s327 + $0x58] sm:$0xff] %v350
                %v352 = vld [vmem:[%s326 + $0x60] sm:$0xff]
                %353 = vst [vmem:[%s327 + $0x60] sm:$0xff] %v352
                %v354 = vld [vmem:[%s326 + $0x68] sm:$0xff]
                %355 = vst [vmem:[%s327 + $0x68] sm:$0xff] %v354
                %v356 = vld [vmem:[%s326 + $0x70] sm:$0xff]
                %357 = vst [vmem:[%s327 + $0x70] sm:$0xff] %v356
                %v358 = vld [vmem:[%s326 + $0x78] sm:$0xff]
                %359 = vst [vmem:[%s327 + $0x78] sm:$0xff] %v358
                %v360 = vld [vmem:[%s326 + $0x80] sm:$0xff]
                %361 = vst [vmem:[%s327 + $0x80] sm:$0xff] %v360
                %v362 = vld [vmem:[%s326 + $0x88] sm:$0xff]
                %363 = vst [vmem:[%s327 + $0x88] sm:$0xff] %v362
                %v364 = vld [vmem:[%s326 + $0x90] sm:$0xff]
                %365 = vst [vmem:[%s327 + $0x90] sm:$0xff] %v364
                %v366 = vld [vmem:[%s326 + $0x98] sm:$0xff]
                %367 = vst [vmem:[%s327 + $0x98] sm:$0xff] %v366
                %v368 = vld [vmem:[%s326 + $0xa0] sm:$0xff]
                %369 = vst [vmem:[%s327 + $0xa0] sm:$0xff] %v368
                %v370 = vld [vmem:[%s326 + $0xa8] sm:$0xff]
                %371 = vst [vmem:[%s327 + $0xa8] sm:$0xff] %v370
              $region76: #{tpu_custom_call.1} parent=70 // loop_footer
                %s325 = sadd.s32 1, %s321
              $region77: #{tpu_custom_call.1} parent=70 // loop_footer_branch
                %320 = sbr.rel target = $region73
              $region78: #{tpu_custom_call.1} parent=70 // loop_exit
                _
              %s372 = sshllo.u32 0, %s315
              loop: start=0, step=1, limit=1
              $region79: #{tpu_custom_call.1} parent=70 // loop_pre_header
                _
              $region80: #{tpu_custom_call.1} parent=70 // loop_header
                %s374 = sphi 0, %s378
                %p375 = scmp.ge.s32.totalorder %s374, 1
                %s379 = sphi %s317, %s317
                %s380 = sphi %s319, %s319
              $region81: #{tpu_custom_call.1} parent=70 // loop_header_branch
                %377 = sbr.rel (%p375) target = $region85
              $region82: #{tpu_custom_call.1} parent=70 // loop_body
                %v381 = vld [vmem:[%s379] sm:%s372]
                %382 = vst [vmem:[%s380] sm:%s372] %v381
              $region83: #{tpu_custom_call.1} parent=70 // loop_footer
                %s378 = sadd.s32 1, %s374
              $region84: #{tpu_custom_call.1} parent=70 // loop_footer_branch
                %373 = sbr.rel target = $region80
              $region85: #{tpu_custom_call.1} parent=70 // loop_exit
                _
            $region71: #{tpu_custom_call.1} parent=55 // pred_fallthru
              _
          $region56: #{tpu_custom_call.1} parent=51 // pred_fallthru
            _
          // Predicated region
          $region57: #{tpu_custom_call.1} parent=51 // pred_check
            %p296 = pneg %p292
          $region58: #{tpu_custom_call.1} parent=51 // pred_check_branch
            %298 = sbr.rel (%p296) target = $region60
          $region59: #{tpu_custom_call.1} parent=51 // pred_region
            %s299 = sshllo.u32 0, 180
            loop: start=0, step=1, limit=1
            $region61: #{tpu_custom_call.1} parent=59 // loop_pre_header
              _
            $region62: #{tpu_custom_call.1} parent=59 // loop_header
              %s301 = sphi 0, %s305
              %p302 = scmp.ge.s32.totalorder %s301, 1
              %s306 = sphi %s290, %s290
              %s307 = sphi [#allocation2], [#allocation2]
            $region63: #{tpu_custom_call.1} parent=59 // loop_header_branch
              %304 = sbr.rel (%p302) target = $region67
            $region64: #{tpu_custom_call.1} parent=59 // loop_body
              %v308 = vld [vmem:[%s306] sm:%s299]
              %309 = vst [vmem:[%s307] sm:%s299] %v308
            $region65: #{tpu_custom_call.1} parent=59 // loop_footer
              %s305 = sadd.s32 1, %s301
            $region66: #{tpu_custom_call.1} parent=59 // loop_footer_branch
              %300 = sbr.rel target = $region62
            $region67: #{tpu_custom_call.1} parent=59 // loop_exit
              _
          $region60: #{tpu_custom_call.1} parent=51 // pred_fallthru
            _
          // Predicated region
          $region86: #{tpu_custom_call.1} parent=51 // pred_check
            _
          $region87: #{tpu_custom_call.1} parent=51 // pred_check_branch
            %385 = sbr.rel (0) target = $region89
          $region88: #{tpu_custom_call.1} parent=51 // pred_region
            %386 = vsyncadd [#allocation4], 2880
          $region89: #{tpu_custom_call.1} parent=51 // pred_fallthru
            _
        $region52: #{tpu_custom_call.1} parent=47 // pred_fallthru
          _
        %s387 = sadd.s32 %s27, 1
        %p388 = scmp.lt.s32.totalorder %s387, 2
        // Predicated region
        $region90: #{tpu_custom_call.1} parent=47 // pred_check
          %p389 = pneg %p388
        $region91: #{tpu_custom_call.1} parent=47 // pred_check_branch
          %391 = sbr.rel (%p389) target = $region93
        $region92: #{tpu_custom_call.1} parent=47 // pred_region
          %s392 = ssub.s32 1, %s284
          %s393 = smul.u32 %s387, 144
          %s394 = smul.u32 %s26, 328
          %s395 = sadd.s32 %s393, %s394
          %s396 = scalar_lea.vmem %s0, %s395
          %s397 = smul.u32 %s392, 184
          %s398 = scalar_lea.vmem [#allocation2], %s397
          %s399 = scalar_lea.sflag [#allocation4], %s392
          %p401 = scmp.lt.u32.totalorder 180, 8
          %p402 = pneg %p401
          // Predicated region
          $region94: #{tpu_custom_call.1} parent=92 // pred_check
            _
          $region95: #{tpu_custom_call.1} parent=92 // pred_check_branch
            %404 = sbr.rel (%p401) target = $region97
          $region96: #{tpu_custom_call.1} parent=92 // pred_region
            %s419 = sand.u32 180, 7
            %p420 = scmp.eq.s32.totalorder %s419, 0
            %p421 = pneg %p420
            // Predicated region
            $region109: #{tpu_custom_call.1} parent=96 // pred_check
              _
            $region110: #{tpu_custom_call.1} parent=96 // pred_check_branch
              %423 = sbr.rel (%p420) target = $region112
            $region111: #{tpu_custom_call.1} parent=96 // pred_region
              %s424 = sand.u32 180, 7
              %s425 = ssub.s32 180, %s424
              %s426 = scalar_lea.vmem %s396, %s425
              %s427 = ssub.s32 180, %s424
              %s428 = scalar_lea.vmem %s398, %s427 [#allocation2]
              loop: start=0, step=1, limit=1
              $region113: #{tpu_custom_call.1} parent=111 // loop_pre_header
                _
              $region114: #{tpu_custom_call.1} parent=111 // loop_header
                %s430 = sphi 0, %s434
                %p431 = scmp.ge.s32.totalorder %s430, 1
                %s435 = sphi %s396, %s396
                %s436 = sphi %s398, %s398
              $region115: #{tpu_custom_call.1} parent=111 // loop_header_branch
                %433 = sbr.rel (%p431) target = $region119
              $region116: #{tpu_custom_call.1} parent=111 // loop_body
                %v437 = vld [vmem:[%s435] sm:$0xff]
                %438 = vst [vmem:[%s436] sm:$0xff] %v437
                %v439 = vld [vmem:[%s435 + $0x8] sm:$0xff]
                %440 = vst [vmem:[%s436 + $0x8] sm:$0xff] %v439
                %v441 = vld [vmem:[%s435 + $0x10] sm:$0xff]
                %442 = vst [vmem:[%s436 + $0x10] sm:$0xff] %v441
                %v443 = vld [vmem:[%s435 + $0x18] sm:$0xff]
                %444 = vst [vmem:[%s436 + $0x18] sm:$0xff] %v443
                %v445 = vld [vmem:[%s435 + $0x20] sm:$0xff]
                %446 = vst [vmem:[%s436 + $0x20] sm:$0xff] %v445
                %v447 = vld [vmem:[%s435 + $0x28] sm:$0xff]
                %448 = vst [vmem:[%s436 + $0x28] sm:$0xff] %v447
                %v449 = vld [vmem:[%s435 + $0x30] sm:$0xff]
                %450 = vst [vmem:[%s436 + $0x30] sm:$0xff] %v449
                %v451 = vld [vmem:[%s435 + $0x38] sm:$0xff]
                %452 = vst [vmem:[%s436 + $0x38] sm:$0xff] %v451
                %v453 = vld [vmem:[%s435 + $0x40] sm:$0xff]
                %454 = vst [vmem:[%s436 + $0x40] sm:$0xff] %v453
                %v455 = vld [vmem:[%s435 + $0x48] sm:$0xff]
                %456 = vst [vmem:[%s436 + $0x48] sm:$0xff] %v455
                %v457 = vld [vmem:[%s435 + $0x50] sm:$0xff]
                %458 = vst [vmem:[%s436 + $0x50] sm:$0xff] %v457
                %v459 = vld [vmem:[%s435 + $0x58] sm:$0xff]
                %460 = vst [vmem:[%s436 + $0x58] sm:$0xff] %v459
                %v461 = vld [vmem:[%s435 + $0x60] sm:$0xff]
                %462 = vst [vmem:[%s436 + $0x60] sm:$0xff] %v461
                %v463 = vld [vmem:[%s435 + $0x68] sm:$0xff]
                %464 = vst [vmem:[%s436 + $0x68] sm:$0xff] %v463
                %v465 = vld [vmem:[%s435 + $0x70] sm:$0xff]
                %466 = vst [vmem:[%s436 + $0x70] sm:$0xff] %v465
                %v467 = vld [vmem:[%s435 + $0x78] sm:$0xff]
                %468 = vst [vmem:[%s436 + $0x78] sm:$0xff] %v467
                %v469 = vld [vmem:[%s435 + $0x80] sm:$0xff]
                %470 = vst [vmem:[%s436 + $0x80] sm:$0xff] %v469
                %v471 = vld [vmem:[%s435 + $0x88] sm:$0xff]
                %472 = vst [vmem:[%s436 + $0x88] sm:$0xff] %v471
                %v473 = vld [vmem:[%s435 + $0x90] sm:$0xff]
                %474 = vst [vmem:[%s436 + $0x90] sm:$0xff] %v473
                %v475 = vld [vmem:[%s435 + $0x98] sm:$0xff]
                %476 = vst [vmem:[%s436 + $0x98] sm:$0xff] %v475
                %v477 = vld [vmem:[%s435 + $0xa0] sm:$0xff]
                %478 = vst [vmem:[%s436 + $0xa0] sm:$0xff] %v477
                %v479 = vld [vmem:[%s435 + $0xa8] sm:$0xff]
                %480 = vst [vmem:[%s436 + $0xa8] sm:$0xff] %v479
              $region117: #{tpu_custom_call.1} parent=111 // loop_footer
                %s434 = sadd.s32 1, %s430
              $region118: #{tpu_custom_call.1} parent=111 // loop_footer_branch
                %429 = sbr.rel target = $region114
              $region119: #{tpu_custom_call.1} parent=111 // loop_exit
                _
              %s481 = sshllo.u32 0, %s424
              loop: start=0, step=1, limit=1
              $region120: #{tpu_custom_call.1} parent=111 // loop_pre_header
                _
              $region121: #{tpu_custom_call.1} parent=111 // loop_header
                %s483 = sphi 0, %s487
                %p484 = scmp.ge.s32.totalorder %s483, 1
                %s488 = sphi %s426, %s426
                %s489 = sphi %s428, %s428
              $region122: #{tpu_custom_call.1} parent=111 // loop_header_branch
                %486 = sbr.rel (%p484) target = $region126
              $region123: #{tpu_custom_call.1} parent=111 // loop_body
                %v490 = vld [vmem:[%s488] sm:%s481]
                %491 = vst [vmem:[%s489] sm:%s481] %v490
              $region124: #{tpu_custom_call.1} parent=111 // loop_footer
                %s487 = sadd.s32 1, %s483
              $region125: #{tpu_custom_call.1} parent=111 // loop_footer_branch
                %482 = sbr.rel target = $region121
              $region126: #{tpu_custom_call.1} parent=111 // loop_exit
                _
            $region112: #{tpu_custom_call.1} parent=96 // pred_fallthru
              _
          $region97: #{tpu_custom_call.1} parent=92 // pred_fallthru
            _
          // Predicated region
          $region98: #{tpu_custom_call.1} parent=92 // pred_check
            %p405 = pneg %p401
          $region99: #{tpu_custom_call.1} parent=92 // pred_check_branch
            %407 = sbr.rel (%p405) target = $region101
          $region100: #{tpu_custom_call.1} parent=92 // pred_region
            %s408 = sshllo.u32 0, 180
            loop: start=0, step=1, limit=1
            $region102: #{tpu_custom_call.1} parent=100 // loop_pre_header
              _
            $region103: #{tpu_custom_call.1} parent=100 // loop_header
              %s410 = sphi 0, %s414
              %p411 = scmp.ge.s32.totalorder %s410, 1
              %s415 = sphi %s396, %s396
              %s416 = sphi %s398, %s398
            $region104: #{tpu_custom_call.1} parent=100 // loop_header_branch
              %413 = sbr.rel (%p411) target = $region108
            $region105: #{tpu_custom_call.1} parent=100 // loop_body
              %v417 = vld [vmem:[%s415] sm:%s408]
              %418 = vst [vmem:[%s416] sm:%s408] %v417
            $region106: #{tpu_custom_call.1} parent=100 // loop_footer
              %s414 = sadd.s32 1, %s410
            $region107: #{tpu_custom_call.1} parent=100 // loop_footer_branch
              %409 = sbr.rel target = $region103
            $region108: #{tpu_custom_call.1} parent=100 // loop_exit
              _
          $region101: #{tpu_custom_call.1} parent=92 // pred_fallthru
            _
          // Predicated region
          $region127: #{tpu_custom_call.1} parent=92 // pred_check
            _
          $region128: #{tpu_custom_call.1} parent=92 // pred_check_branch
            %494 = sbr.rel (0) target = $region130
          $region129: #{tpu_custom_call.1} parent=92 // pred_region
            %495 = vsyncadd %s399, 2880
          $region130: #{tpu_custom_call.1} parent=92 // pred_fallthru
            _
        $region93: #{tpu_custom_call.1} parent=47 // pred_fallthru
          _
        %s496 = smul.u32 %s284, 184
        %s497 = scalar_lea.vmem [#allocation2], %s496
        %s498 = scalar_lea.sflag [#allocation4], %s284
        %s499 = smul.u32 180, 1
        %s500 = sshll.u32 %s499, 4
        %501 = dma.done %s498, %s500
        %s502 = smul.u32 %s27, 144
        %s503 = scalar_lea.vmem %s1, %s502
        %v504 = vld [vmem:[%s503] sm:$0xff]
        %v505 = vld [vmem:[%s503 + $0x8] sm:$0xff]
        %v506 = vld [vmem:[%s503 + $0x10] sm:$0xff]
        %v507 = vld [vmem:[%s503 + $0x18] sm:$0xff]
        %v508 = vld [vmem:[%s503 + $0x20] sm:$0xff]
        %v509 = vld [vmem:[%s503 + $0x28] sm:$0xff]
        %v510 = vld [vmem:[%s503 + $0x30] sm:$0xff]
        %v511 = vld [vmem:[%s503 + $0x38] sm:$0xff]
        %v512 = vld [vmem:[%s503 + $0x40] sm:$0xff]
        %v513 = vld [vmem:[%s503 + $0x48] sm:$0xff]
        %v514 = vld [vmem:[%s503 + $0x50] sm:$0xff]
        %v515 = vld [vmem:[%s503 + $0x58] sm:$0xff]
        %v516 = vld [vmem:[%s503 + $0x60] sm:$0xff]
        %v517 = vld [vmem:[%s503 + $0x68] sm:$0xff]
        %v518 = vld [vmem:[%s503 + $0x70] sm:$0xff]
        %v519 = vld [vmem:[%s503 + $0x78] sm:$0xff]
        %v520 = vld [vmem:[%s503 + $0x80] sm:$0xff]
        %v521 = vld [vmem:[%s503 + $0x88] sm:$0xff]
        %v522 = vld [vmem:[%s503 + $0x90] sm:$0xff]
        %v523 = vld [vmem:[%s503 + $0x98] sm:$0xff]
        %v524 = vld [vmem:[%s503 + $0xa0] sm:$0xff]
        %v525 = vld [vmem:[%s503 + $0xa8] sm:$0xff]
        %v526 = vld [vmem:[%s503 + $0xb0] sm:$0xf]
        %v527 = vld [vmem:[%s497] sm:$0xff]
        %v528 = vld [vmem:[%s497 + $0x8] sm:$0xff]
        %v529 = vld [vmem:[%s497 + $0x10] sm:$0xff]
        %v530 = vld [vmem:[%s497 + $0x18] sm:$0xff]
        %v531 = vld [vmem:[%s497 + $0x20] sm:$0xff]
        %v532 = vld [vmem:[%s497 + $0x28] sm:$0xff]
        %v533 = vld [vmem:[%s497 + $0x30] sm:$0xff]
        %v534 = vld [vmem:[%s497 + $0x38] sm:$0xff]
        %v535 = vld [vmem:[%s497 + $0x40] sm:$0xff]
        %v536 = vld [vmem:[%s497 + $0x48] sm:$0xff]
        %v537 = vld [vmem:[%s497 + $0x50] sm:$0xff]
        %v538 = vld [vmem:[%s497 + $0x58] sm:$0xff]
        %v539 = vld [vmem:[%s497 + $0x60] sm:$0xff]
        %v540 = vld [vmem:[%s497 + $0x68] sm:$0xff]
        %v541 = vld [vmem:[%s497 + $0x70] sm:$0xff]
        %v542 = vld [vmem:[%s497 + $0x78] sm:$0xff]
        %v543 = vld [vmem:[%s497 + $0x80] sm:$0xff]
        %v544 = vld [vmem:[%s497 + $0x88] sm:$0xff]
        %v545 = vld [vmem:[%s497 + $0x90] sm:$0xff]
        %v546 = vld [vmem:[%s497 + $0x98] sm:$0xff]
        %v547 = vld [vmem:[%s497 + $0xa0] sm:$0xff]
        %v548 = vld [vmem:[%s497 + $0xa8] sm:$0xff]
        %v549 = vld [vmem:[%s497 + $0xb0] sm:$0xf]
        %v550 = vld [vmem:[%s2] sm:$0xff]
        %v551 = vld [vmem:[%s2 + $0x8] sm:$0xff]
        %v552 = vld [vmem:[%s2 + $0x10] sm:$0xff]
        %v553 = vld [vmem:[%s2 + $0x18] sm:$0xff]
        %v554 = vld [vmem:[%s2 + $0x20] sm:$0xff]
        %v555 = vld [vmem:[%s2 + $0x28] sm:$0xff]
        %v556 = vld [vmem:[%s2 + $0x30] sm:$0xff]
        %v557 = vld [vmem:[%s2 + $0x38] sm:$0xff]
        %v558 = vld [vmem:[%s2 + $0x40] sm:$0xff]
        %v559 = vld [vmem:[%s2 + $0x48] sm:$0xff]
        %v560 = vld [vmem:[%s2 + $0x50] sm:$0xff]
        %v561 = vld [vmem:[%s2 + $0x58] sm:$0xff]
        %v562 = vld [vmem:[%s2 + $0x60] sm:$0xff]
        %v563 = vld [vmem:[%s2 + $0x68] sm:$0xff]
        %v564 = vld [vmem:[%s2 + $0x70] sm:$0xff]
        %v565 = vld [vmem:[%s2 + $0x78] sm:$0xff]
        %v566 = vld [vmem:[%s3] sm:$0x1]
        %v568 = vlaneseq
        %v569 = vshrl.u32 %v568, 7
        %v570 = vsub.s32 0, %v569
        %v571 = vrot.slane %v566, %v570
        %573 = vmatprep.subr.mxu0 0.0
        %574 = vmatpush1.msra.mxu0 %v550
        %575 = vmatprep.subr.mxu0 0.0
        %576 = vmatpush1.msra.mxu0 %v551
        %577 = vmatprep.subr.mxu0 0.0
        %578 = vmatpush1.msra.mxu0 %v552
        %579 = vmatprep.subr.mxu0 0.0
        %580 = vmatpush1.msra.mxu0 %v553
        %581 = vmatprep.subr.mxu0 0.0
        %582 = vmatpush1.msra.mxu0 %v554
        %583 = vmatprep.subr.mxu0 0.0
        %584 = vmatpush1.msra.mxu0 %v555
        %585 = vmatprep.subr.mxu0 0.0
        %586 = vmatpush1.msra.mxu0 %v556
        %587 = vmatprep.subr.mxu0 0.0
        %588 = vmatpush1.msra.mxu0 %v557
        %589 = vmatprep.subr.mxu0 0.0
        %590 = vmatpush1.msra.mxu0 %v558
        %591 = vmatprep.subr.mxu0 0.0
        %592 = vmatpush1.msra.mxu0 %v559
        %593 = vmatprep.subr.mxu0 0.0
        %594 = vmatpush1.msra.mxu0 %v560
        %595 = vmatprep.subr.mxu0 0.0
        %596 = vmatpush1.msra.mxu0 %v561
        %597 = vmatprep.subr.mxu0 0.0
        %598 = vmatpush1.msra.mxu0 %v562
        %599 = vmatprep.subr.mxu0 0.0
        %600 = vmatpush1.msra.mxu0 %v563
        %601 = vmatprep.subr.mxu0 0.0
        %602 = vmatpush1.msra.mxu0 %v564
        %603 = vmatprep.subr.mxu0 0.0
        %604 = vmatpush1.msra.mxu0 %v565
        %605 = vmatprep.subr.mxu0 0.0
        %606 = vmatpush1.msra.mxu0 0.0
        %607 = vmatprep.subr.mxu0 0.0
        %608 = vmatpush1.msra.mxu0 0.0
        %609 = vmatprep.subr.mxu0 0.0
        %610 = vmatpush1.msra.mxu0 0.0
        %611 = vmatprep.subr.mxu0 0.0
        %612 = vmatpush1.msra.mxu0 0.0
        %613 = vmatprep.subr.mxu0 0.0
        %614 = vmatpush1.msra.mxu0 0.0
        %615 = vmatprep.subr.mxu0 0.0
        %616 = vmatpush1.msra.mxu0 0.0
        %617 = vmatprep.subr.mxu0 0.0
        %618 = vmatpush1.msra.mxu0 0.0
        %619 = vmatprep.subr.mxu0 0.0
        %620 = vmatpush1.msra.mxu0 0.0
        %621 = vmatprep.subr.mxu0 0.0
        %622 = vmatpush1.msra.mxu0 0.0
        %623 = vmatprep.subr.mxu0 0.0
        %624 = vmatpush1.msra.mxu0 0.0
        %625 = vmatprep.subr.mxu0 0.0
        %626 = vmatpush1.msra.mxu0 0.0
        %627 = vmatprep.subr.mxu0 0.0
        %628 = vmatpush1.msra.mxu0 0.0
        %629 = vmatprep.subr.mxu0 0.0
        %630 = vmatpush1.msra.mxu0 0.0
        %631 = vmatprep.subr.mxu0 0.0
        %632 = vmatpush1.msra.mxu0 0.0
        %633 = vmatprep.subr.mxu0 0.0
        %634 = vmatpush1.msra.mxu0 0.0
        %635 = vmatprep.subr.mxu0 0.0
        %636 = vmatpush1.msra.mxu0 0.0
        %637 = vmatprep.mubr.f32.mxu0 0.0
        %638 = vmatmul.mubr.f32.gmra.mrb[0].mxu0 %v527
        %v639 = vpop.f32.mrb[0].mxu0
        %v640 = vadd.f32 %v571, %v639
        %v641 = vpop.f32.mrb[0].mxu0
        %642 = vmatprep.mubr.f32.mxu0 0.0
        %643 = vmatmul.mubr.f32.gmra.mrb[0].mxu0 %v528
        %v644 = vpop.f32.mrb[0].mxu0
        %v645 = vadd.f32 %v571, %v644
        %v646 = vpop.f32.mrb[0].mxu0
        %647 = vmatprep.mubr.f32.mxu0 0.0
        %648 = vmatmul.mubr.f32.gmra.mrb[0].mxu0 %v529
        %v649 = vpop.f32.mrb[0].mxu0
        %v650 = vadd.f32 %v571, %v649
        %v651 = vpop.f32.mrb[0].mxu0
        %652 = vmatprep.mubr.f32.mxu0 0.0
        %653 = vmatmul.mubr.f32.gmra.mrb[0].mxu0 %v530
        %v654 = vpop.f32.mrb[0].mxu0
        %v655 = vadd.f32 %v571, %v654
        %v656 = vpop.f32.mrb[0].mxu0
        %657 = vmatprep.mubr.f32.mxu0 0.0
        %658 = vmatmul.mubr.f32.gmra.mrb[0].mxu0 %v531
        %v659 = vpop.f32.mrb[0].mxu0
        %v660 = vadd.f32 %v571, %v659
        %v661 = vpop.f32.mrb[0].mxu0
        %662 = vmatprep.mubr.f32.mxu0 0.0
        %663 = vmatmul.mubr.f32.gmra.mrb[0].mxu0 %v532
        %v664 = vpop.f32.mrb[0].mxu0
        %v665 = vadd.f32 %v571, %v664
        %v666 = vpop.f32.mrb[0].mxu0
        %667 = vmatprep.mubr.f32.mxu0 0.0
        %668 = vmatmul.mubr.f32.gmra.mrb[0].mxu0 %v533
        %v669 = vpop.f32.mrb[0].mxu0
        %v670 = vadd.f32 %v571, %v669
        %v671 = vpop.f32.mrb[0].mxu0
        %672 = vmatprep.mubr.f32.mxu0 0.0
        %673 = vmatmul.mubr.f32.gmra.mrb[0].mxu0 %v534
        %v674 = vpop.f32.mrb[0].mxu0
        %v675 = vadd.f32 %v571, %v674
        %v676 = vpop.f32.mrb[0].mxu0
        %677 = vmatprep.mubr.f32.mxu0 0.0
        %678 = vmatmul.mubr.f32.gmra.mrb[0].mxu0 %v535
        %v679 = vpop.f32.mrb[0].mxu0
        %v680 = vadd.f32 %v571, %v679
        %v681 = vpop.f32.mrb[0].mxu0
        %682 = vmatprep.mubr.f32.mxu0 0.0
        %683 = vmatmul.mubr.f32.gmra.mrb[0].mxu0 %v536
        %v684 = vpop.f32.mrb[0].mxu0
        %v685 = vadd.f32 %v571, %v684
        %v686 = vpop.f32.mrb[0].mxu0
        %687 = vmatprep.mubr.f32.mxu0 0.0
        %688 = vmatmul.mubr.f32.gmra.mrb[0].mxu0 %v537
        %v689 = vpop.f32.mrb[0].mxu0
        %v690 = vadd.f32 %v571, %v689
        %v691 = vpop.f32.mrb[0].mxu0
        %692 = vmatprep.mubr.f32.mxu0 0.0
        %693 = vmatmul.mubr.f32.gmra.mrb[0].mxu0 %v538
        %v694 = vpop.f32.mrb[0].mxu0
        %v695 = vadd.f32 %v571, %v694
        %v696 = vpop.f32.mrb[0].mxu0
        %697 = vmatprep.mubr.f32.mxu0 0.0
        %698 = vmatmul.mubr.f32.gmra.mrb[0].mxu0 %v539
        %v699 = vpop.f32.mrb[0].mxu0
        %v700 = vadd.f32 %v571, %v699
        %v701 = vpop.f32.mrb[0].mxu0
        %702 = vmatprep.mubr.f32.mxu0 0.0
        %703 = vmatmul.mubr.f32.gmra.mrb[0].mxu0 %v540
        %v704 = vpop.f32.mrb[0].mxu0
        %v705 = vadd.f32 %v571, %v704
        %v706 = vpop.f32.mrb[0].mxu0
        %707 = vmatprep.mubr.f32.mxu0 0.0
        %708 = vmatmul.mubr.f32.gmra.mrb[0].mxu0 %v541
        %v709 = vpop.f32.mrb[0].mxu0
        %v710 = vadd.f32 %v571, %v709
        %v711 = vpop.f32.mrb[0].mxu0
        %712 = vmatprep.mubr.f32.mxu0 0.0
        %713 = vmatmul.mubr.f32.gmra.mrb[0].mxu0 %v542
        %v714 = vpop.f32.mrb[0].mxu0
        %v715 = vadd.f32 %v571, %v714
        %v716 = vpop.f32.mrb[0].mxu0
        %717 = vmatprep.mubr.f32.mxu0 0.0
        %718 = vmatmul.mubr.f32.gmra.mrb[0].mxu0 %v543
        %v719 = vpop.f32.mrb[0].mxu0
        %v720 = vadd.f32 %v571, %v719
        %v721 = vpop.f32.mrb[0].mxu0
        %722 = vmatprep.mubr.f32.mxu0 0.0
        %723 = vmatmul.mubr.f32.gmra.mrb[0].mxu0 %v544
        %v724 = vpop.f32.mrb[0].mxu0
        %v725 = vadd.f32 %v571, %v724
        %v726 = vpop.f32.mrb[0].mxu0
        %727 = vmatprep.mubr.f32.mxu0 0.0
        %728 = vmatmul.mubr.f32.gmra.mrb[0].mxu0 %v545
        %v729 = vpop.f32.mrb[0].mxu0
        %v730 = vadd.f32 %v571, %v729
        %v731 = vpop.f32.mrb[0].mxu0
        %732 = vmatprep.mubr.f32.mxu0 0.0
        %733 = vmatmul.mubr.f32.gmra.mrb[0].mxu0 %v546
        %v734 = vpop.f32.mrb[0].mxu0
        %v735 = vadd.f32 %v571, %v734
        %v736 = vpop.f32.mrb[0].mxu0
        %737 = vmatprep.mubr.f32.mxu0 0.0
        %738 = vmatmul.mubr.f32.gmra.mrb[0].mxu0 %v547
        %v739 = vpop.f32.mrb[0].mxu0
        %v740 = vadd.f32 %v571, %v739
        %v741 = vpop.f32.mrb[0].mxu0
        %742 = vmatprep.mubr.f32.mxu0 0.0
        %743 = vmatmul.mubr.f32.gmra.mrb[0].mxu0 %v548
        %v744 = vpop.f32.mrb[0].mxu0
        %v745 = vadd.f32 %v571, %v744
        %v746 = vpop.f32.mrb[0].mxu0
        %747 = vmatprep.mubr.f32.mxu0 0.0
        %748 = vmatmul.mubr.f32.gmra.mrb[0].mxu0 %v549
        %v749 = vpop.f32.mrb[0].mxu0
        %v750 = vadd.f32 %v571, %v749
        %v751 = vpop.f32.mrb[0].mxu0
        %752 = vdwg.mxu0
        %v753 = vmax.f32 %v640, 0.0
        %v754 = vmax.f32 %v645, 0.0
        %v755 = vmax.f32 %v650, 0.0
        %v756 = vmax.f32 %v655, 0.0
        %v757 = vmax.f32 %v660, 0.0
        %v758 = vmax.f32 %v665, 0.0
        %v759 = vmax.f32 %v670, 0.0
        %v760 = vmax.f32 %v675, 0.0
        %v761 = vmax.f32 %v680, 0.0
        %v762 = vmax.f32 %v685, 0.0
        %v763 = vmax.f32 %v690, 0.0
        %v764 = vmax.f32 %v695, 0.0
        %v765 = vmax.f32 %v700, 0.0
        %v766 = vmax.f32 %v705, 0.0
        %v767 = vmax.f32 %v710, 0.0
        %v768 = vmax.f32 %v715, 0.0
        %v769 = vmax.f32 %v720, 0.0
        %v770 = vmax.f32 %v725, 0.0
        %v771 = vmax.f32 %v730, 0.0
        %v772 = vmax.f32 %v735, 0.0
        %v773 = vmax.f32 %v740, 0.0
        %v774 = vmax.f32 %v745, 0.0
        %v775 = vmax.f32 %v750, 0.0
        %v776 = vmin.f32 %v753, 6.0
        %v777 = vmin.f32 %v754, 6.0
        %v778 = vmin.f32 %v755, 6.0
        %v779 = vmin.f32 %v756, 6.0
        %v780 = vmin.f32 %v757, 6.0
        %v781 = vmin.f32 %v758, 6.0
        %v782 = vmin.f32 %v759, 6.0
        %v783 = vmin.f32 %v760, 6.0
        %v784 = vmin.f32 %v761, 6.0
        %v785 = vmin.f32 %v762, 6.0
        %v786 = vmin.f32 %v763, 6.0
        %v787 = vmin.f32 %v764, 6.0
        %v788 = vmin.f32 %v765, 6.0
        %v789 = vmin.f32 %v766, 6.0
        %v790 = vmin.f32 %v767, 6.0
        %v791 = vmin.f32 %v768, 6.0
        %v792 = vmin.f32 %v769, 6.0
        %v793 = vmin.f32 %v770, 6.0
        %v794 = vmin.f32 %v771, 6.0
        %v795 = vmin.f32 %v772, 6.0
        %v796 = vmin.f32 %v773, 6.0
        %v797 = vmin.f32 %v774, 6.0
        %v798 = vmin.f32 %v775, 6.0
        %800 = vset.pattern.permute.xlu0 0
        %801 = vperm.xlu0 %800, %v504
        %v802 = vpop.permute.xlu0 %801
        %805 = vset.pattern.permute.xlu0 0
        %806 = vperm.xlu0 %805, %v505
        %v807 = vpop.permute.xlu0 %806
        %810 = vset.pattern.permute.xlu0 0
        %811 = vperm.xlu0 %810, %v506
        %v812 = vpop.permute.xlu0 %811
        %815 = vset.pattern.permute.xlu0 0
        %816 = vperm.xlu0 %815, %v507
        %v817 = vpop.permute.xlu0 %816
        %820 = vset.pattern.permute.xlu0 0
        %821 = vperm.xlu0 %820, %v508
        %v822 = vpop.permute.xlu0 %821
        %825 = vset.pattern.permute.xlu0 0
        %826 = vperm.xlu0 %825, %v509
        %v827 = vpop.permute.xlu0 %826
        %830 = vset.pattern.permute.xlu0 0
        %831 = vperm.xlu0 %830, %v510
        %v832 = vpop.permute.xlu0 %831
        %835 = vset.pattern.permute.xlu0 0
        %836 = vperm.xlu0 %835, %v511
        %v837 = vpop.permute.xlu0 %836
        %840 = vset.pattern.permute.xlu0 0
        %841 = vperm.xlu0 %840, %v512
        %v842 = vpop.permute.xlu0 %841
        %845 = vset.pattern.permute.xlu0 0
        %846 = vperm.xlu0 %845, %v513
        %v847 = vpop.permute.xlu0 %846
        %850 = vset.pattern.permute.xlu0 0
        %851 = vperm.xlu0 %850, %v514
        %v852 = vpop.permute.xlu0 %851
        %855 = vset.pattern.permute.xlu0 0
        %856 = vperm.xlu0 %855, %v515
        %v857 = vpop.permute.xlu0 %856
        %860 = vset.pattern.permute.xlu0 0
        %861 = vperm.xlu0 %860, %v516
        %v862 = vpop.permute.xlu0 %861
        %865 = vset.pattern.permute.xlu0 0
        %866 = vperm.xlu0 %865, %v517
        %v867 = vpop.permute.xlu0 %866
        %870 = vset.pattern.permute.xlu0 0
        %871 = vperm.xlu0 %870, %v518
        %v872 = vpop.permute.xlu0 %871
        %875 = vset.pattern.permute.xlu0 0
        %876 = vperm.xlu0 %875, %v519
        %v877 = vpop.permute.xlu0 %876
        %880 = vset.pattern.permute.xlu0 0
        %881 = vperm.xlu0 %880, %v520
        %v882 = vpop.permute.xlu0 %881
        %885 = vset.pattern.permute.xlu0 0
        %886 = vperm.xlu0 %885, %v521
        %v887 = vpop.permute.xlu0 %886
        %890 = vset.pattern.permute.xlu0 0
        %891 = vperm.xlu0 %890, %v522
        %v892 = vpop.permute.xlu0 %891
        %895 = vset.pattern.permute.xlu0 0
        %896 = vperm.xlu0 %895, %v523
        %v897 = vpop.permute.xlu0 %896
        %900 = vset.pattern.permute.xlu0 0
        %901 = vperm.xlu0 %900, %v524
        %v902 = vpop.permute.xlu0 %901
        %905 = vset.pattern.permute.xlu0 0
        %906 = vperm.xlu0 %905, %v525
        %v907 = vpop.permute.xlu0 %906
        %910 = vset.pattern.permute.xlu0 0
        %911 = vperm.xlu0 %910, %v526
        %v912 = vpop.permute.xlu0 %911
        %v914 = vmul.f32 %v776, %v802
        %v915 = vmul.f32 %v777, %v807
        %v916 = vmul.f32 %v778, %v812
        %v917 = vmul.f32 %v779, %v817
        %v918 = vmul.f32 %v780, %v822
        %v919 = vmul.f32 %v781, %v827
        %v920 = vmul.f32 %v782, %v832
        %v921 = vmul.f32 %v783, %v837
        %v922 = vmul.f32 %v784, %v842
        %v923 = vmul.f32 %v785, %v847
        %v924 = vmul.f32 %v786, %v852
        %v925 = vmul.f32 %v787, %v857
        %v926 = vmul.f32 %v788, %v862
        %v927 = vmul.f32 %v789, %v867
        %v928 = vmul.f32 %v790, %v872
        %v929 = vmul.f32 %v791, %v877
        %v930 = vmul.f32 %v792, %v882
        %v931 = vmul.f32 %v793, %v887
        %v932 = vmul.f32 %v794, %v892
        %v933 = vmul.f32 %v795, %v897
        %v934 = vmul.f32 %v796, %v902
        %v935 = vmul.f32 %v797, %v907
        %v936 = vmul.f32 %v798, %v912
        %937 = vst [vmem:[#allocation3] sm:$0xff] %v914
        %938 = vst [vmem:[#allocation3 + $0x8] sm:$0xff] %v915
        %939 = vst [vmem:[#allocation3 + $0x10] sm:$0xff] %v916
        %940 = vst [vmem:[#allocation3 + $0x18] sm:$0xff] %v917
        %941 = vst [vmem:[#allocation3 + $0x20] sm:$0xff] %v918
        %942 = vst [vmem:[#allocation3 + $0x28] sm:$0xff] %v919
        %943 = vst [vmem:[#allocation3 + $0x30] sm:$0xff] %v920
        %944 = vst [vmem:[#allocation3 + $0x38] sm:$0xff] %v921
        %945 = vst [vmem:[#allocation3 + $0x40] sm:$0xff] %v922
        %946 = vst [vmem:[#allocation3 + $0x48] sm:$0xff] %v923
        %947 = vst [vmem:[#allocation3 + $0x50] sm:$0xff] %v924
        %948 = vst [vmem:[#allocation3 + $0x58] sm:$0xff] %v925
        %949 = vst [vmem:[#allocation3 + $0x60] sm:$0xff] %v926
        %950 = vst [vmem:[#allocation3 + $0x68] sm:$0xff] %v927
        %951 = vst [vmem:[#allocation3 + $0x70] sm:$0xff] %v928
        %952 = vst [vmem:[#allocation3 + $0x78] sm:$0xff] %v929
        %953 = vst [vmem:[#allocation3 + $0x80] sm:$0xff] %v930
        %954 = vst [vmem:[#allocation3 + $0x88] sm:$0xff] %v931
        %955 = vst [vmem:[#allocation3 + $0x90] sm:$0xff] %v932
        %956 = vst [vmem:[#allocation3 + $0x98] sm:$0xff] %v933
        %957 = vst [vmem:[#allocation3 + $0xa0] sm:$0xff] %v934
        %958 = vst [vmem:[#allocation3 + $0xa8] sm:$0xff] %v935
        %959 = vst [vmem:[#allocation3 + $0xb0] sm:$0xf] %v936
        %960 = vst [vmem:[#allocation3 + $0xb4] sm:$0x7] 0.0
        %v961 = vld [vmem:[%s4] sm:$0xff]
        %v962 = vld [vmem:[%s4 + $0x8] sm:$0x1]
        %v963 = vld [vmem:[%s5] sm:$0x1]
        %v964 = vld [vmem:[#allocation3] sm:$0xff]
        %v965 = vld [vmem:[#allocation3 + $0x8] sm:$0xff]
        %v966 = vld [vmem:[#allocation3 + $0x10] sm:$0xff]
        %v967 = vld [vmem:[#allocation3 + $0x18] sm:$0xff]
        %v968 = vld [vmem:[#allocation3 + $0x20] sm:$0xff]
        %v969 = vld [vmem:[#allocation3 + $0x28] sm:$0xff]
        %v970 = vld [vmem:[#allocation3 + $0x30] sm:$0xff]
        %v971 = vld [vmem:[#allocation3 + $0x38] sm:$0xff]
        %v972 = vld [vmem:[#allocation3 + $0x40] sm:$0xff]
        %v973 = vld [vmem:[#allocation3 + $0x48] sm:$0xff]
        %v974 = vld [vmem:[#allocation3 + $0x50] sm:$0xff]
        %v975 = vld [vmem:[#allocation3 + $0x58] sm:$0xff]
        %v976 = vld [vmem:[#allocation3 + $0x60] sm:$0xff]
        %v977 = vld [vmem:[#allocation3 + $0x68] sm:$0xff]
        %v978 = vld [vmem:[#allocation3 + $0x70] sm:$0xff]
        %v979 = vld [vmem:[#allocation3 + $0x78] sm:$0xff]
        %v980 = vld [vmem:[#allocation3 + $0x80] sm:$0xff]
        %v981 = vld [vmem:[#allocation3 + $0x88] sm:$0xff]
        %v982 = vlaneseq
        %v983 = vshrl.u32 %v982, 7
        %v984 = vsub.s32 0, %v983
        %v985 = vrot.slane %v961, %v984
        %v986 = vmul.f32 %v964, %v985
        %v987 = vmul.f32 %v965, %v985
        %v988 = vmul.f32 %v966, %v985
        %v989 = vmul.f32 %v967, %v985
        %v990 = vmul.f32 %v968, %v985
        %v991 = vmul.f32 %v969, %v985
        %v992 = vmul.f32 %v970, %v985
        %v993 = vmul.f32 %v971, %v985
        %v994 = vmul.f32 %v972, %v985
        %v995 = vmul.f32 %v973, %v985
        %v996 = vmul.f32 %v974, %v985
        %v997 = vmul.f32 %v975, %v985
        %v998 = vmul.f32 %v976, %v985
        %v999 = vmul.f32 %v977, %v985
        %v1000 = vmul.f32 %v978, %v985
        %v1001 = vmul.f32 %v979, %v985
        %v1002 = vmul.f32 %v980, %v985
        %v1003 = vmul.f32 %v981, %v985
        %v1004 = vadd.f32 %v986, 0.0
        %v1005 = vadd.f32 %v987, 0.0
        %v1006 = vadd.f32 %v988, 0.0
        %v1007 = vadd.f32 %v989, 0.0
        %v1008 = vadd.f32 %v990, 0.0
        %v1009 = vadd.f32 %v991, 0.0
        %v1010 = vadd.f32 %v992, 0.0
        %v1011 = vadd.f32 %v993, 0.0
        %v1012 = vadd.f32 %v994, 0.0
        %v1013 = vadd.f32 %v995, 0.0
        %v1014 = vadd.f32 %v996, 0.0
        %v1015 = vadd.f32 %v997, 0.0
        %v1016 = vadd.f32 %v998, 0.0
        %v1017 = vadd.f32 %v999, 0.0
        %v1018 = vadd.f32 %v1000, 0.0
        %v1019 = vadd.f32 %v1001, 0.0
        %v1020 = vadd.f32 %v1002, 0.0
        %v1021 = vadd.f32 %v1003, 0.0
        %v1022 = vld [vmem:[#allocation3 + $0x1] sm:$0xff]
        %v1023 = vld [vmem:[#allocation3 + $0x9] sm:$0xff]
        %v1024 = vld [vmem:[#allocation3 + $0x11] sm:$0xff]
        %v1025 = vld [vmem:[#allocation3 + $0x19] sm:$0xff]
        %v1026 = vld [vmem:[#allocation3 + $0x21] sm:$0xff]
        %v1027 = vld [vmem:[#allocation3 + $0x29] sm:$0xff]
        %v1028 = vld [vmem:[#allocation3 + $0x31] sm:$0xff]
        %v1029 = vld [vmem:[#allocation3 + $0x39] sm:$0xff]
        %v1030 = vld [vmem:[#allocation3 + $0x41] sm:$0xff]
        %v1031 = vld [vmem:[#allocation3 + $0x49] sm:$0xff]
        %v1032 = vld [vmem:[#allocation3 + $0x51] sm:$0xff]
        %v1033 = vld [vmem:[#allocation3 + $0x59] sm:$0xff]
        %v1034 = vld [vmem:[#allocation3 + $0x61] sm:$0xff]
        %v1035 = vld [vmem:[#allocation3 + $0x69] sm:$0xff]
        %v1036 = vld [vmem:[#allocation3 + $0x71] sm:$0xff]
        %v1037 = vld [vmem:[#allocation3 + $0x79] sm:$0xff]
        %v1038 = vld [vmem:[#allocation3 + $0x81] sm:$0xff]
        %v1039 = vld [vmem:[#allocation3 + $0x89] sm:$0xff]
        %v1040 = vlaneseq
        %v1041 = vshrl.u32 %v1040, 7
        %v1042 = vsub.s32 1, %v1041
        %v1043 = vrot.slane %v961, %v1042
        %v1044 = vmul.f32 %v1022, %v1043
        %v1045 = vmul.f32 %v1023, %v1043
        %v1046 = vmul.f32 %v1024, %v1043
        %v1047 = vmul.f32 %v1025, %v1043
        %v1048 = vmul.f32 %v1026, %v1043
        %v1049 = vmul.f32 %v1027, %v1043
        %v1050 = vmul.f32 %v1028, %v1043
        %v1051 = vmul.f32 %v1029, %v1043
        %v1052 = vmul.f32 %v1030, %v1043
        %v1053 = vmul.f32 %v1031, %v1043
        %v1054 = vmul.f32 %v1032, %v1043
        %v1055 = vmul.f32 %v1033, %v1043
        %v1056 = vmul.f32 %v1034, %v1043
        %v1057 = vmul.f32 %v1035, %v1043
        %v1058 = vmul.f32 %v1036, %v1043
        %v1059 = vmul.f32 %v1037, %v1043
        %v1060 = vmul.f32 %v1038, %v1043
        %v1061 = vmul.f32 %v1039, %v1043
        %v1062 = vadd.f32 %v1004, %v1044
        %v1063 = vadd.f32 %v1005, %v1045
        %v1064 = vadd.f32 %v1006, %v1046
        %v1065 = vadd.f32 %v1007, %v1047
        %v1066 = vadd.f32 %v1008, %v1048
        %v1067 = vadd.f32 %v1009, %v1049
        %v1068 = vadd.f32 %v1010, %v1050
        %v1069 = vadd.f32 %v1011, %v1051
        %v1070 = vadd.f32 %v1012, %v1052
        %v1071 = vadd.f32 %v1013, %v1053
        %v1072 = vadd.f32 %v1014, %v1054
        %v1073 = vadd.f32 %v1015, %v1055
        %v1074 = vadd.f32 %v1016, %v1056
        %v1075 = vadd.f32 %v1017, %v1057
        %v1076 = vadd.f32 %v1018, %v1058
        %v1077 = vadd.f32 %v1019, %v1059
        %v1078 = vadd.f32 %v1020, %v1060
        %v1079 = vadd.f32 %v1021, %v1061
        %v1080 = vld [vmem:[#allocation3 + $0x2] sm:$0xff]
        %v1081 = vld [vmem:[#allocation3 + $0xa] sm:$0xff]
        %v1082 = vld [vmem:[#allocation3 + $0x12] sm:$0xff]
        %v1083 = vld [vmem:[#allocation3 + $0x1a] sm:$0xff]
        %v1084 = vld [vmem:[#allocation3 + $0x22] sm:$0xff]
        %v1085 = vld [vmem:[#allocation3 + $0x2a] sm:$0xff]
        %v1086 = vld [vmem:[#allocation3 + $0x32] sm:$0xff]
        %v1087 = vld [vmem:[#allocation3 + $0x3a] sm:$0xff]
        %v1088 = vld [vmem:[#allocation3 + $0x42] sm:$0xff]
        %v1089 = vld [vmem:[#allocation3 + $0x4a] sm:$0xff]
        %v1090 = vld [vmem:[#allocation3 + $0x52] sm:$0xff]
        %v1091 = vld [vmem:[#allocation3 + $0x5a] sm:$0xff]
        %v1092 = vld [vmem:[#allocation3 + $0x62] sm:$0xff]
        %v1093 = vld [vmem:[#allocation3 + $0x6a] sm:$0xff]
        %v1094 = vld [vmem:[#allocation3 + $0x72] sm:$0xff]
        %v1095 = vld [vmem:[#allocation3 + $0x7a] sm:$0xff]
        %v1096 = vld [vmem:[#allocation3 + $0x82] sm:$0xff]
        %v1097 = vld [vmem:[#allocation3 + $0x8a] sm:$0xff]
        %v1098 = vlaneseq
        %v1099 = vshrl.u32 %v1098, 7
        %v1100 = vsub.s32 2, %v1099
        %v1101 = vrot.slane %v961, %v1100
        %v1102 = vmul.f32 %v1080, %v1101
        %v1103 = vmul.f32 %v1081, %v1101
        %v1104 = vmul.f32 %v1082, %v1101
        %v1105 = vmul.f32 %v1083, %v1101
        %v1106 = vmul.f32 %v1084, %v1101
        %v1107 = vmul.f32 %v1085, %v1101
        %v1108 = vmul.f32 %v1086, %v1101
        %v1109 = vmul.f32 %v1087, %v1101
        %v1110 = vmul.f32 %v1088, %v1101
        %v1111 = vmul.f32 %v1089, %v1101
        %v1112 = vmul.f32 %v1090, %v1101
        %v1113 = vmul.f32 %v1091, %v1101
        %v1114 = vmul.f32 %v1092, %v1101
        %v1115 = vmul.f32 %v1093, %v1101
        %v1116 = vmul.f32 %v1094, %v1101
        %v1117 = vmul.f32 %v1095, %v1101
        %v1118 = vmul.f32 %v1096, %v1101
        %v1119 = vmul.f32 %v1097, %v1101
        %v1120 = vadd.f32 %v1062, %v1102
        %v1121 = vadd.f32 %v1063, %v1103
        %v1122 = vadd.f32 %v1064, %v1104
        %v1123 = vadd.f32 %v1065, %v1105
        %v1124 = vadd.f32 %v1066, %v1106
        %v1125 = vadd.f32 %v1067, %v1107
        %v1126 = vadd.f32 %v1068, %v1108
        %v1127 = vadd.f32 %v1069, %v1109
        %v1128 = vadd.f32 %v1070, %v1110
        %v1129 = vadd.f32 %v1071, %v1111
        %v1130 = vadd.f32 %v1072, %v1112
        %v1131 = vadd.f32 %v1073, %v1113
        %v1132 = vadd.f32 %v1074, %v1114
        %v1133 = vadd.f32 %v1075, %v1115
        %v1134 = vadd.f32 %v1076, %v1116
        %v1135 = vadd.f32 %v1077, %v1117
        %v1136 = vadd.f32 %v1078, %v1118
        %v1137 = vadd.f32 %v1079, %v1119
        %v1138 = vld [vmem:[#allocation3 + $0x92] sm:$0xff]
        %v1139 = vld [vmem:[#allocation3 + $0x9a] sm:$0xff]
        %v1140 = vlaneseq
        %v1141 = vshrl.u32 %v1140, 7
        %v1142 = vsub.s32 3, %v1141
        %v1143 = vrot.slane %v961, %v1142
        %v1144 = vmul.f32 %v1082, %v1143
        %v1145 = vmul.f32 %v1083, %v1143
        %v1146 = vmul.f32 %v1084, %v1143
        %v1147 = vmul.f32 %v1085, %v1143
        %v1148 = vmul.f32 %v1086, %v1143
        %v1149 = vmul.f32 %v1087, %v1143
        %v1150 = vmul.f32 %v1088, %v1143
        %v1151 = vmul.f32 %v1089, %v1143
        %v1152 = vmul.f32 %v1090, %v1143
        %v1153 = vmul.f32 %v1091, %v1143
        %v1154 = vmul.f32 %v1092, %v1143
        %v1155 = vmul.f32 %v1093, %v1143
        %v1156 = vmul.f32 %v1094, %v1143
        %v1157 = vmul.f32 %v1095, %v1143
        %v1158 = vmul.f32 %v1096, %v1143
        %v1159 = vmul.f32 %v1097, %v1143
        %v1160 = vmul.f32 %v1138, %v1143
        %v1161 = vmul.f32 %v1139, %v1143
        %v1162 = vadd.f32 %v1120, %v1144
        %v1163 = vadd.f32 %v1121, %v1145
        %v1164 = vadd.f32 %v1122, %v1146
        %v1165 = vadd.f32 %v1123, %v1147
        %v1166 = vadd.f32 %v1124, %v1148
        %v1167 = vadd.f32 %v1125, %v1149
        %v1168 = vadd.f32 %v1126, %v1150
        %v1169 = vadd.f32 %v1127, %v1151
        %v1170 = vadd.f32 %v1128, %v1152
        %v1171 = vadd.f32 %v1129, %v1153
        %v1172 = vadd.f32 %v1130, %v1154
        %v1173 = vadd.f32 %v1131, %v1155
        %v1174 = vadd.f32 %v1132, %v1156
        %v1175 = vadd.f32 %v1133, %v1157
        %v1176 = vadd.f32 %v1134, %v1158
        %v1177 = vadd.f32 %v1135, %v1159
        %v1178 = vadd.f32 %v1136, %v1160
        %v1179 = vadd.f32 %v1137, %v1161
        %v1180 = vld [vmem:[#allocation3 + $0x13] sm:$0xff]
        %v1181 = vld [vmem:[#allocation3 + $0x1b] sm:$0xff]
        %v1182 = vld [vmem:[#allocation3 + $0x23] sm:$0xff]
        %v1183 = vld [vmem:[#allocation3 + $0x2b] sm:$0xff]
        %v1184 = vld [vmem:[#allocation3 + $0x33] sm:$0xff]
        %v1185 = vld [vmem:[#allocation3 + $0x3b] sm:$0xff]
        %v1186 = vld [vmem:[#allocation3 + $0x43] sm:$0xff]
        %v1187 = vld [vmem:[#allocation3 + $0x4b] sm:$0xff]
        %v1188 = vld [vmem:[#allocation3 + $0x53] sm:$0xff]
        %v1189 = vld [vmem:[#allocation3 + $0x5b] sm:$0xff]
        %v1190 = vld [vmem:[#allocation3 + $0x63] sm:$0xff]
        %v1191 = vld [vmem:[#allocation3 + $0x6b] sm:$0xff]
        %v1192 = vld [vmem:[#allocation3 + $0x73] sm:$0xff]
        %v1193 = vld [vmem:[#allocation3 + $0x7b] sm:$0xff]
        %v1194 = vld [vmem:[#allocation3 + $0x83] sm:$0xff]
        %v1195 = vld [vmem:[#allocation3 + $0x8b] sm:$0xff]
        %v1196 = vld [vmem:[#allocation3 + $0x93] sm:$0xff]
        %v1197 = vld [vmem:[#allocation3 + $0x9b] sm:$0xff]
        %v1198 = vlaneseq
        %v1199 = vshrl.u32 %v1198, 7
        %v1200 = vsub.s32 4, %v1199
        %v1201 = vrot.slane %v961, %v1200
        %v1202 = vmul.f32 %v1180, %v1201
        %v1203 = vmul.f32 %v1181, %v1201
        %v1204 = vmul.f32 %v1182, %v1201
        %v1205 = vmul.f32 %v1183, %v1201
        %v1206 = vmul.f32 %v1184, %v1201
        %v1207 = vmul.f32 %v1185, %v1201
        %v1208 = vmul.f32 %v1186, %v1201
        %v1209 = vmul.f32 %v1187, %v1201
        %v1210 = vmul.f32 %v1188, %v1201
        %v1211 = vmul.f32 %v1189, %v1201
        %v1212 = vmul.f32 %v1190, %v1201
        %v1213 = vmul.f32 %v1191, %v1201
        %v1214 = vmul.f32 %v1192, %v1201
        %v1215 = vmul.f32 %v1193, %v1201
        %v1216 = vmul.f32 %v1194, %v1201
        %v1217 = vmul.f32 %v1195, %v1201
        %v1218 = vmul.f32 %v1196, %v1201
        %v1219 = vmul.f32 %v1197, %v1201
        %v1220 = vadd.f32 %v1162, %v1202
        %v1221 = vadd.f32 %v1163, %v1203
        %v1222 = vadd.f32 %v1164, %v1204
        %v1223 = vadd.f32 %v1165, %v1205
        %v1224 = vadd.f32 %v1166, %v1206
        %v1225 = vadd.f32 %v1167, %v1207
        %v1226 = vadd.f32 %v1168, %v1208
        %v1227 = vadd.f32 %v1169, %v1209
        %v1228 = vadd.f32 %v1170, %v1210
        %v1229 = vadd.f32 %v1171, %v1211
        %v1230 = vadd.f32 %v1172, %v1212
        %v1231 = vadd.f32 %v1173, %v1213
        %v1232 = vadd.f32 %v1174, %v1214
        %v1233 = vadd.f32 %v1175, %v1215
        %v1234 = vadd.f32 %v1176, %v1216
        %v1235 = vadd.f32 %v1177, %v1217
        %v1236 = vadd.f32 %v1178, %v1218
        %v1237 = vadd.f32 %v1179, %v1219
        %v1238 = vld [vmem:[#allocation3 + $0x14] sm:$0xff]
        %v1239 = vld [vmem:[#allocation3 + $0x1c] sm:$0xff]
        %v1240 = vld [vmem:[#allocation3 + $0x24] sm:$0xff]
        %v1241 = vld [vmem:[#allocation3 + $0x2c] sm:$0xff]
        %v1242 = vld [vmem:[#allocation3 + $0x34] sm:$0xff]
        %v1243 = vld [vmem:[#allocation3 + $0x3c] sm:$0xff]
        %v1244 = vld [vmem:[#allocation3 + $0x44] sm:$0xff]
        %v1245 = vld [vmem:[#allocation3 + $0x4c] sm:$0xff]
        %v1246 = vld [vmem:[#allocation3 + $0x54] sm:$0xff]
        %v1247 = vld [vmem:[#allocation3 + $0x5c] sm:$0xff]
        %v1248 = vld [vmem:[#allocation3 + $0x64] sm:$0xff]
        %v1249 = vld [vmem:[#allocation3 + $0x6c] sm:$0xff]
        %v1250 = vld [vmem:[#allocation3 + $0x74] sm:$0xff]
        %v1251 = vld [vmem:[#allocation3 + $0x7c] sm:$0xff]
        %v1252 = vld [vmem:[#allocation3 + $0x84] sm:$0xff]
        %v1253 = vld [vmem:[#allocation3 + $0x8c] sm:$0xff]
        %v1254 = vld [vmem:[#allocation3 + $0x94] sm:$0xff]
        %v1255 = vld [vmem:[#allocation3 + $0x9c] sm:$0xff]
        %v1256 = vlaneseq
        %v1257 = vshrl.u32 %v1256, 7
        %v1258 = vsub.s32 5, %v1257
        %v1259 = vrot.slane %v961, %v1258
        %v1260 = vmul.f32 %v1238, %v1259
        %v1261 = vmul.f32 %v1239, %v1259
        %v1262 = vmul.f32 %v1240, %v1259
        %v1263 = vmul.f32 %v1241, %v1259
        %v1264 = vmul.f32 %v1242, %v1259
        %v1265 = vmul.f32 %v1243, %v1259
        %v1266 = vmul.f32 %v1244, %v1259
        %v1267 = vmul.f32 %v1245, %v1259
        %v1268 = vmul.f32 %v1246, %v1259
        %v1269 = vmul.f32 %v1247, %v1259
        %v1270 = vmul.f32 %v1248, %v1259
        %v1271 = vmul.f32 %v1249, %v1259
        %v1272 = vmul.f32 %v1250, %v1259
        %v1273 = vmul.f32 %v1251, %v1259
        %v1274 = vmul.f32 %v1252, %v1259
        %v1275 = vmul.f32 %v1253, %v1259
        %v1276 = vmul.f32 %v1254, %v1259
        %v1277 = vmul.f32 %v1255, %v1259
        %v1278 = vadd.f32 %v1220, %v1260
        %v1279 = vadd.f32 %v1221, %v1261
        %v1280 = vadd.f32 %v1222, %v1262
        %v1281 = vadd.f32 %v1223, %v1263
        %v1282 = vadd.f32 %v1224, %v1264
        %v1283 = vadd.f32 %v1225, %v1265
        %v1284 = vadd.f32 %v1226, %v1266
        %v1285 = vadd.f32 %v1227, %v1267
        %v1286 = vadd.f32 %v1228, %v1268
        %v1287 = vadd.f32 %v1229, %v1269
        %v1288 = vadd.f32 %v1230, %v1270
        %v1289 = vadd.f32 %v1231, %v1271
        %v1290 = vadd.f32 %v1232, %v1272
        %v1291 = vadd.f32 %v1233, %v1273
        %v1292 = vadd.f32 %v1234, %v1274
        %v1293 = vadd.f32 %v1235, %v1275
        %v1294 = vadd.f32 %v1236, %v1276
        %v1295 = vadd.f32 %v1237, %v1277
        %v1296 = vld [vmem:[#allocation3 + $0xa4] sm:$0xff]
        %v1297 = vld [vmem:[#allocation3 + $0xac] sm:$0xff]
        %v1298 = vlaneseq
        %v1299 = vshrl.u32 %v1298, 7
        %v1300 = vsub.s32 6, %v1299
        %v1301 = vrot.slane %v961, %v1300
        %v1302 = vmul.f32 %v1240, %v1301
        %v1303 = vmul.f32 %v1241, %v1301
        %v1304 = vmul.f32 %v1242, %v1301
        %v1305 = vmul.f32 %v1243, %v1301
        %v1306 = vmul.f32 %v1244, %v1301
        %v1307 = vmul.f32 %v1245, %v1301
        %v1308 = vmul.f32 %v1246, %v1301
        %v1309 = vmul.f32 %v1247, %v1301
        %v1310 = vmul.f32 %v1248, %v1301
        %v1311 = vmul.f32 %v1249, %v1301
        %v1312 = vmul.f32 %v1250, %v1301
        %v1313 = vmul.f32 %v1251, %v1301
        %v1314 = vmul.f32 %v1252, %v1301
        %v1315 = vmul.f32 %v1253, %v1301
        %v1316 = vmul.f32 %v1254, %v1301
        %v1317 = vmul.f32 %v1255, %v1301
        %v1318 = vmul.f32 %v1296, %v1301
        %v1319 = vmul.f32 %v1297, %v1301
        %v1320 = vadd.f32 %v1278, %v1302
        %v1321 = vadd.f32 %v1279, %v1303
        %v1322 = vadd.f32 %v1280, %v1304
        %v1323 = vadd.f32 %v1281, %v1305
        %v1324 = vadd.f32 %v1282, %v1306
        %v1325 = vadd.f32 %v1283, %v1307
        %v1326 = vadd.f32 %v1284, %v1308
        %v1327 = vadd.f32 %v1285, %v1309
        %v1328 = vadd.f32 %v1286, %v1310
        %v1329 = vadd.f32 %v1287, %v1311
        %v1330 = vadd.f32 %v1288, %v1312
        %v1331 = vadd.f32 %v1289, %v1313
        %v1332 = vadd.f32 %v1290, %v1314
        %v1333 = vadd.f32 %v1291, %v1315
        %v1334 = vadd.f32 %v1292, %v1316
        %v1335 = vadd.f32 %v1293, %v1317
        %v1336 = vadd.f32 %v1294, %v1318
        %v1337 = vadd.f32 %v1295, %v1319
        %v1338 = vld [vmem:[#allocation3 + $0x25] sm:$0xff]
        %v1339 = vld [vmem:[#allocation3 + $0x2d] sm:$0xff]
        %v1340 = vld [vmem:[#allocation3 + $0x35] sm:$0xff]
        %v1341 = vld [vmem:[#allocation3 + $0x3d] sm:$0xff]
        %v1342 = vld [vmem:[#allocation3 + $0x45] sm:$0xff]
        %v1343 = vld [vmem:[#allocation3 + $0x4d] sm:$0xff]
        %v1344 = vld [vmem:[#allocation3 + $0x55] sm:$0xff]
        %v1345 = vld [vmem:[#allocation3 + $0x5d] sm:$0xff]
        %v1346 = vld [vmem:[#allocation3 + $0x65] sm:$0xff]
        %v1347 = vld [vmem:[#allocation3 + $0x6d] sm:$0xff]
        %v1348 = vld [vmem:[#allocation3 + $0x75] sm:$0xff]
        %v1349 = vld [vmem:[#allocation3 + $0x7d] sm:$0xff]
        %v1350 = vld [vmem:[#allocation3 + $0x85] sm:$0xff]
        %v1351 = vld [vmem:[#allocation3 + $0x8d] sm:$0xff]
        %v1352 = vld [vmem:[#allocation3 + $0x95] sm:$0xff]
        %v1353 = vld [vmem:[#allocation3 + $0x9d] sm:$0xff]
        %v1354 = vld [vmem:[#allocation3 + $0xa5] sm:$0xff]
        %v1355 = vld [vmem:[#allocation3 + $0xad] sm:$0xff]
        %v1356 = vlaneseq
        %v1357 = vshrl.u32 %v1356, 7
        %v1358 = vsub.s32 7, %v1357
        %v1359 = vrot.slane %v961, %v1358
        %v1360 = vmul.f32 %v1338, %v1359
        %v1361 = vmul.f32 %v1339, %v1359
        %v1362 = vmul.f32 %v1340, %v1359
        %v1363 = vmul.f32 %v1341, %v1359
        %v1364 = vmul.f32 %v1342, %v1359
        %v1365 = vmul.f32 %v1343, %v1359
        %v1366 = vmul.f32 %v1344, %v1359
        %v1367 = vmul.f32 %v1345, %v1359
        %v1368 = vmul.f32 %v1346, %v1359
        %v1369 = vmul.f32 %v1347, %v1359
        %v1370 = vmul.f32 %v1348, %v1359
        %v1371 = vmul.f32 %v1349, %v1359
        %v1372 = vmul.f32 %v1350, %v1359
        %v1373 = vmul.f32 %v1351, %v1359
        %v1374 = vmul.f32 %v1352, %v1359
        %v1375 = vmul.f32 %v1353, %v1359
        %v1376 = vmul.f32 %v1354, %v1359
        %v1377 = vmul.f32 %v1355, %v1359
        %v1378 = vadd.f32 %v1320, %v1360
        %v1379 = vadd.f32 %v1321, %v1361
        %v1380 = vadd.f32 %v1322, %v1362
        %v1381 = vadd.f32 %v1323, %v1363
        %v1382 = vadd.f32 %v1324, %v1364
        %v1383 = vadd.f32 %v1325, %v1365
        %v1384 = vadd.f32 %v1326, %v1366
        %v1385 = vadd.f32 %v1327, %v1367
        %v1386 = vadd.f32 %v1328, %v1368
        %v1387 = vadd.f32 %v1329, %v1369
        %v1388 = vadd.f32 %v1330, %v1370
        %v1389 = vadd.f32 %v1331, %v1371
        %v1390 = vadd.f32 %v1332, %v1372
        %v1391 = vadd.f32 %v1333, %v1373
        %v1392 = vadd.f32 %v1334, %v1374
        %v1393 = vadd.f32 %v1335, %v1375
        %v1394 = vadd.f32 %v1336, %v1376
        %v1395 = vadd.f32 %v1337, %v1377
        %v1396 = vld [vmem:[#allocation3 + $0x26] sm:$0xff]
        %v1397 = vld [vmem:[#allocation3 + $0x2e] sm:$0xff]
        %v1398 = vld [vmem:[#allocation3 + $0x36] sm:$0xff]
        %v1399 = vld [vmem:[#allocation3 + $0x3e] sm:$0xff]
        %v1400 = vld [vmem:[#allocation3 + $0x46] sm:$0xff]
        %v1401 = vld [vmem:[#allocation3 + $0x4e] sm:$0xff]
        %v1402 = vld [vmem:[#allocation3 + $0x56] sm:$0xff]
        %v1403 = vld [vmem:[#allocation3 + $0x5e] sm:$0xff]
        %v1404 = vld [vmem:[#allocation3 + $0x66] sm:$0xff]
        %v1405 = vld [vmem:[#allocation3 + $0x6e] sm:$0xff]
        %v1406 = vld [vmem:[#allocation3 + $0x76] sm:$0xff]
        %v1407 = vld [vmem:[#allocation3 + $0x7e] sm:$0xff]
        %v1408 = vld [vmem:[#allocation3 + $0x86] sm:$0xff]
        %v1409 = vld [vmem:[#allocation3 + $0x8e] sm:$0xff]
        %v1410 = vld [vmem:[#allocation3 + $0x96] sm:$0xff]
        %v1411 = vld [vmem:[#allocation3 + $0x9e] sm:$0xff]
        %v1412 = vld [vmem:[#allocation3 + $0xa6] sm:$0xff]
        %v1413 = vld [vmem:[#allocation3 + $0xae] sm:$0xff]
        %v1414 = vlaneseq
        %v1415 = vshrl.u32 %v1414, 7
        %v1416 = vsub.s32 0, %v1415
        %v1417 = vrot.slane %v962, %v1416
        %v1418 = vmul.f32 %v1396, %v1417
        %v1419 = vmul.f32 %v1397, %v1417
        %v1420 = vmul.f32 %v1398, %v1417
        %v1421 = vmul.f32 %v1399, %v1417
        %v1422 = vmul.f32 %v1400, %v1417
        %v1423 = vmul.f32 %v1401, %v1417
        %v1424 = vmul.f32 %v1402, %v1417
        %v1425 = vmul.f32 %v1403, %v1417
        %v1426 = vmul.f32 %v1404, %v1417
        %v1427 = vmul.f32 %v1405, %v1417
        %v1428 = vmul.f32 %v1406, %v1417
        %v1429 = vmul.f32 %v1407, %v1417
        %v1430 = vmul.f32 %v1408, %v1417
        %v1431 = vmul.f32 %v1409, %v1417
        %v1432 = vmul.f32 %v1410, %v1417
        %v1433 = vmul.f32 %v1411, %v1417
        %v1434 = vmul.f32 %v1412, %v1417
        %v1435 = vmul.f32 %v1413, %v1417
        %v1436 = vadd.f32 %v1378, %v1418
        %v1437 = vadd.f32 %v1379, %v1419
        %v1438 = vadd.f32 %v1380, %v1420
        %v1439 = vadd.f32 %v1381, %v1421
        %v1440 = vadd.f32 %v1382, %v1422
        %v1441 = vadd.f32 %v1383, %v1423
        %v1442 = vadd.f32 %v1384, %v1424
        %v1443 = vadd.f32 %v1385, %v1425
        %v1444 = vadd.f32 %v1386, %v1426
        %v1445 = vadd.f32 %v1387, %v1427
        %v1446 = vadd.f32 %v1388, %v1428
        %v1447 = vadd.f32 %v1389, %v1429
        %v1448 = vadd.f32 %v1390, %v1430
        %v1449 = vadd.f32 %v1391, %v1431
        %v1450 = vadd.f32 %v1392, %v1432
        %v1451 = vadd.f32 %v1393, %v1433
        %v1452 = vadd.f32 %v1394, %v1434
        %v1453 = vadd.f32 %v1395, %v1435
        %v1455 = vlaneseq
        %v1456 = vshrl.u32 %v1455, 7
        %v1457 = vsub.s32 0, %v1456
        %v1458 = vrot.slane %v963, %v1457
        %v1460 = vadd.f32 %v1436, %v1458
        %v1461 = vadd.f32 %v1437, %v1458
        %v1462 = vadd.f32 %v1438, %v1458
        %v1463 = vadd.f32 %v1439, %v1458
        %v1464 = vadd.f32 %v1440, %v1458
        %v1465 = vadd.f32 %v1441, %v1458
        %v1466 = vadd.f32 %v1442, %v1458
        %v1467 = vadd.f32 %v1443, %v1458
        %v1468 = vadd.f32 %v1444, %v1458
        %v1469 = vadd.f32 %v1445, %v1458
        %v1470 = vadd.f32 %v1446, %v1458
        %v1471 = vadd.f32 %v1447, %v1458
        %v1472 = vadd.f32 %v1448, %v1458
        %v1473 = vadd.f32 %v1449, %v1458
        %v1474 = vadd.f32 %v1450, %v1458
        %v1475 = vadd.f32 %v1451, %v1458
        %v1476 = vadd.f32 %v1452, %v1458
        %v1477 = vadd.f32 %v1453, %v1458
        %v1478 = vmax.f32 %v1460, 0.0
        %v1479 = vmax.f32 %v1461, 0.0
        %v1480 = vmax.f32 %v1462, 0.0
        %v1481 = vmax.f32 %v1463, 0.0
        %v1482 = vmax.f32 %v1464, 0.0
        %v1483 = vmax.f32 %v1465, 0.0
        %v1484 = vmax.f32 %v1466, 0.0
        %v1485 = vmax.f32 %v1467, 0.0
        %v1486 = vmax.f32 %v1468, 0.0
        %v1487 = vmax.f32 %v1469, 0.0
        %v1488 = vmax.f32 %v1470, 0.0
        %v1489 = vmax.f32 %v1471, 0.0
        %v1490 = vmax.f32 %v1472, 0.0
        %v1491 = vmax.f32 %v1473, 0.0
        %v1492 = vmax.f32 %v1474, 0.0
        %v1493 = vmax.f32 %v1475, 0.0
        %v1494 = vmax.f32 %v1476, 0.0
        %v1495 = vmax.f32 %v1477, 0.0
        %v1496 = vmin.f32 %v1478, 6.0
        %v1497 = vmin.f32 %v1479, 6.0
        %v1498 = vmin.f32 %v1480, 6.0
        %v1499 = vmin.f32 %v1481, 6.0
        %v1500 = vmin.f32 %v1482, 6.0
        %v1501 = vmin.f32 %v1483, 6.0
        %v1502 = vmin.f32 %v1484, 6.0
        %v1503 = vmin.f32 %v1485, 6.0
        %v1504 = vmin.f32 %v1486, 6.0
        %v1505 = vmin.f32 %v1487, 6.0
        %v1506 = vmin.f32 %v1488, 6.0
        %v1507 = vmin.f32 %v1489, 6.0
        %v1508 = vmin.f32 %v1490, 6.0
        %v1509 = vmin.f32 %v1491, 6.0
        %v1510 = vmin.f32 %v1492, 6.0
        %v1511 = vmin.f32 %v1493, 6.0
        %v1512 = vmin.f32 %v1494, 6.0
        %v1513 = vmin.f32 %v1495, 6.0
        %v1514 = vld [vmem:[%s6] sm:$0xff]
        %v1515 = vld [vmem:[%s6 + $0x8] sm:$0xff]
        %v1516 = vld [vmem:[%s6 + $0x10] sm:$0xff]
        %v1517 = vld [vmem:[%s6 + $0x18] sm:$0xff]
        %v1518 = vld [vmem:[%s6 + $0x20] sm:$0xff]
        %v1519 = vld [vmem:[%s6 + $0x28] sm:$0xff]
        %v1520 = vld [vmem:[%s6 + $0x30] sm:$0xff]
        %v1521 = vld [vmem:[%s6 + $0x38] sm:$0xff]
        %v1522 = vld [vmem:[%s6 + $0x40] sm:$0xff]
        %v1523 = vld [vmem:[%s6 + $0x48] sm:$0xff]
        %v1524 = vld [vmem:[%s6 + $0x50] sm:$0xff]
        %v1525 = vld [vmem:[%s6 + $0x58] sm:$0xff]
        %v1526 = vld [vmem:[%s6 + $0x60] sm:$0xff]
        %v1527 = vld [vmem:[%s6 + $0x68] sm:$0xff]
        %v1528 = vld [vmem:[%s6 + $0x70] sm:$0xff]
        %v1529 = vld [vmem:[%s6 + $0x78] sm:$0xff]
        %v1530 = vld [vmem:[%s7] sm:$0x1]
        %v1532 = vlaneseq
        %v1533 = vshrl.u32 %v1532, 7
        %v1534 = vsub.s32 0, %v1533
        %v1535 = vrot.slane %v1530, %v1534
        %1537 = vmatprep.subr.mxu0 0.0
        %1538 = vmatpush1.msra.mxu0 %v1514
        %1539 = vmatprep.subr.mxu0 0.0
        %1540 = vmatpush1.msra.mxu0 %v1515
        %1541 = vmatprep.subr.mxu0 0.0
        %1542 = vmatpush1.msra.mxu0 %v1516
        %1543 = vmatprep.subr.mxu0 0.0
        %1544 = vmatpush1.msra.mxu0 %v1517
        %1545 = vmatprep.subr.mxu0 0.0
        %1546 = vmatpush1.msra.mxu0 %v1518
        %1547 = vmatprep.subr.mxu0 0.0
        %1548 = vmatpush1.msra.mxu0 %v1519
        %1549 = vmatprep.subr.mxu0 0.0
        %1550 = vmatpush1.msra.mxu0 %v1520
        %1551 = vmatprep.subr.mxu0 0.0
        %1552 = vmatpush1.msra.mxu0 %v1521
        %1553 = vmatprep.subr.mxu0 0.0
        %1554 = vmatpush1.msra.mxu0 %v1522
        %1555 = vmatprep.subr.mxu0 0.0
        %1556 = vmatpush1.msra.mxu0 %v1523
        %1557 = vmatprep.subr.mxu0 0.0
        %1558 = vmatpush1.msra.mxu0 %v1524
        %1559 = vmatprep.subr.mxu0 0.0
        %1560 = vmatpush1.msra.mxu0 %v1525
        %1561 = vmatprep.subr.mxu0 0.0
        %1562 = vmatpush1.msra.mxu0 %v1526
        %1563 = vmatprep.subr.mxu0 0.0
        %1564 = vmatpush1.msra.mxu0 %v1527
        %1565 = vmatprep.subr.mxu0 0.0
        %1566 = vmatpush1.msra.mxu0 %v1528
        %1567 = vmatprep.subr.mxu0 0.0
        %1568 = vmatpush1.msra.mxu0 %v1529
        %1569 = vmatprep.subr.mxu0 0.0
        %1570 = vmatpush1.msra.mxu0 0.0
        %1571 = vmatprep.subr.mxu0 0.0
        %1572 = vmatpush1.msra.mxu0 0.0
        %1573 = vmatprep.subr.mxu0 0.0
        %1574 = vmatpush1.msra.mxu0 0.0
        %1575 = vmatprep.subr.mxu0 0.0
        %1576 = vmatpush1.msra.mxu0 0.0
        %1577 = vmatprep.subr.mxu0 0.0
        %1578 = vmatpush1.msra.mxu0 0.0
        %1579 = vmatprep.subr.mxu0 0.0
        %1580 = vmatpush1.msra.mxu0 0.0
        %1581 = vmatprep.subr.mxu0 0.0
        %1582 = vmatpush1.msra.mxu0 0.0
        %1583 = vmatprep.subr.mxu0 0.0
        %1584 = vmatpush1.msra.mxu0 0.0
        %1585 = vmatprep.subr.mxu0 0.0
        %1586 = vmatpush1.msra.mxu0 0.0
        %1587 = vmatprep.subr.mxu0 0.0
        %1588 = vmatpush1.msra.mxu0 0.0
        %1589 = vmatprep.subr.mxu0 0.0
        %1590 = vmatpush1.msra.mxu0 0.0
        %1591 = vmatprep.subr.mxu0 0.0
        %1592 = vmatpush1.msra.mxu0 0.0
        %1593 = vmatprep.subr.mxu0 0.0
        %1594 = vmatpush1.msra.mxu0 0.0
        %1595 = vmatprep.subr.mxu0 0.0
        %1596 = vmatpush1.msra.mxu0 0.0
        %1597 = vmatprep.subr.mxu0 0.0
        %1598 = vmatpush1.msra.mxu0 0.0
        %1599 = vmatprep.subr.mxu0 0.0
        %1600 = vmatpush1.msra.mxu0 0.0
        %1601 = vmatprep.mubr.f32.mxu0 0.0
        %1602 = vmatmul.mubr.f32.gmra.mrb[0].mxu0 %v1496
        %v1603 = vpop.f32.mrb[0].mxu0
        %v1604 = vadd.f32 %v1535, %v1603
        %v1605 = vpop.f32.mrb[0].mxu0
        %1606 = vmatprep.mubr.f32.mxu0 0.0
        %1607 = vmatmul.mubr.f32.gmra.mrb[0].mxu0 %v1497
        %v1608 = vpop.f32.mrb[0].mxu0
        %v1609 = vadd.f32 %v1535, %v1608
        %v1610 = vpop.f32.mrb[0].mxu0
        %1611 = vmatprep.mubr.f32.mxu0 0.0
        %1612 = vmatmul.mubr.f32.gmra.mrb[0].mxu0 %v1498
        %v1613 = vpop.f32.mrb[0].mxu0
        %v1614 = vadd.f32 %v1535, %v1613
        %v1615 = vpop.f32.mrb[0].mxu0
        %1616 = vmatprep.mubr.f32.mxu0 0.0
        %1617 = vmatmul.mubr.f32.gmra.mrb[0].mxu0 %v1499
        %v1618 = vpop.f32.mrb[0].mxu0
        %v1619 = vadd.f32 %v1535, %v1618
        %v1620 = vpop.f32.mrb[0].mxu0
        %1621 = vmatprep.mubr.f32.mxu0 0.0
        %1622 = vmatmul.mubr.f32.gmra.mrb[0].mxu0 %v1500
        %v1623 = vpop.f32.mrb[0].mxu0
        %v1624 = vadd.f32 %v1535, %v1623
        %v1625 = vpop.f32.mrb[0].mxu0
        %1626 = vmatprep.mubr.f32.mxu0 0.0
        %1627 = vmatmul.mubr.f32.gmra.mrb[0].mxu0 %v1501
        %v1628 = vpop.f32.mrb[0].mxu0
        %v1629 = vadd.f32 %v1535, %v1628
        %v1630 = vpop.f32.mrb[0].mxu0
        %1631 = vmatprep.mubr.f32.mxu0 0.0
        %1632 = vmatmul.mubr.f32.gmra.mrb[0].mxu0 %v1502
        %v1633 = vpop.f32.mrb[0].mxu0
        %v1634 = vadd.f32 %v1535, %v1633
        %v1635 = vpop.f32.mrb[0].mxu0
        %1636 = vmatprep.mubr.f32.mxu0 0.0
        %1637 = vmatmul.mubr.f32.gmra.mrb[0].mxu0 %v1503
        %v1638 = vpop.f32.mrb[0].mxu0
        %v1639 = vadd.f32 %v1535, %v1638
        %v1640 = vpop.f32.mrb[0].mxu0
        %1641 = vmatprep.mubr.f32.mxu0 0.0
        %1642 = vmatmul.mubr.f32.gmra.mrb[0].mxu0 %v1504
        %v1643 = vpop.f32.mrb[0].mxu0
        %v1644 = vadd.f32 %v1535, %v1643
        %v1645 = vpop.f32.mrb[0].mxu0
        %1646 = vmatprep.mubr.f32.mxu0 0.0
        %1647 = vmatmul.mubr.f32.gmra.mrb[0].mxu0 %v1505
        %v1648 = vpop.f32.mrb[0].mxu0
        %v1649 = vadd.f32 %v1535, %v1648
        %v1650 = vpop.f32.mrb[0].mxu0
        %1651 = vmatprep.mubr.f32.mxu0 0.0
        %1652 = vmatmul.mubr.f32.gmra.mrb[0].mxu0 %v1506
        %v1653 = vpop.f32.mrb[0].mxu0
        %v1654 = vadd.f32 %v1535, %v1653
        %v1655 = vpop.f32.mrb[0].mxu0
        %1656 = vmatprep.mubr.f32.mxu0 0.0
        %1657 = vmatmul.mubr.f32.gmra.mrb[0].mxu0 %v1507
        %v1658 = vpop.f32.mrb[0].mxu0
        %v1659 = vadd.f32 %v1535, %v1658
        %v1660 = vpop.f32.mrb[0].mxu0
        %1661 = vmatprep.mubr.f32.mxu0 0.0
        %1662 = vmatmul.mubr.f32.gmra.mrb[0].mxu0 %v1508
        %v1663 = vpop.f32.mrb[0].mxu0
        %v1664 = vadd.f32 %v1535, %v1663
        %v1665 = vpop.f32.mrb[0].mxu0
        %1666 = vmatprep.mubr.f32.mxu0 0.0
        %1667 = vmatmul.mubr.f32.gmra.mrb[0].mxu0 %v1509
        %v1668 = vpop.f32.mrb[0].mxu0
        %v1669 = vadd.f32 %v1535, %v1668
        %v1670 = vpop.f32.mrb[0].mxu0
        %1671 = vmatprep.mubr.f32.mxu0 0.0
        %1672 = vmatmul.mubr.f32.gmra.mrb[0].mxu0 %v1510
        %v1673 = vpop.f32.mrb[0].mxu0
        %v1674 = vadd.f32 %v1535, %v1673
        %v1675 = vpop.f32.mrb[0].mxu0
        %1676 = vmatprep.mubr.f32.mxu0 0.0
        %1677 = vmatmul.mubr.f32.gmra.mrb[0].mxu0 %v1511
        %v1678 = vpop.f32.mrb[0].mxu0
        %v1679 = vadd.f32 %v1535, %v1678
        %v1680 = vpop.f32.mrb[0].mxu0
        %1681 = vmatprep.mubr.f32.mxu0 0.0
        %1682 = vmatmul.mubr.f32.gmra.mrb[0].mxu0 %v1512
        %v1683 = vpop.f32.mrb[0].mxu0
        %v1684 = vadd.f32 %v1535, %v1683
        %v1685 = vpop.f32.mrb[0].mxu0
        %1686 = vmatprep.mubr.f32.mxu0 0.0
        %1687 = vmatmul.mubr.f32.gmra.mrb[0].mxu0 %v1513
        %v1688 = vpop.f32.mrb[0].mxu0
        %v1689 = vadd.f32 %v1535, %v1688
        %v1690 = vpop.f32.mrb[0].mxu0
        %1691 = vdwg.mxu0
        %v1692 = vld [vmem:[%s497 + $0x13] sm:$0xff]
        %v1693 = vld [vmem:[%s497 + $0x1b] sm:$0xff]
        %v1694 = vld [vmem:[%s497 + $0x23] sm:$0xff]
        %v1695 = vld [vmem:[%s497 + $0x2b] sm:$0xff]
        %v1696 = vld [vmem:[%s497 + $0x33] sm:$0xff]
        %v1697 = vld [vmem:[%s497 + $0x3b] sm:$0xff]
        %v1698 = vld [vmem:[%s497 + $0x43] sm:$0xff]
        %v1699 = vld [vmem:[%s497 + $0x4b] sm:$0xff]
        %v1700 = vld [vmem:[%s497 + $0x53] sm:$0xff]
        %v1701 = vld [vmem:[%s497 + $0x5b] sm:$0xff]
        %v1702 = vld [vmem:[%s497 + $0x63] sm:$0xff]
        %v1703 = vld [vmem:[%s497 + $0x6b] sm:$0xff]
        %v1704 = vld [vmem:[%s497 + $0x73] sm:$0xff]
        %v1705 = vld [vmem:[%s497 + $0x7b] sm:$0xff]
        %v1706 = vld [vmem:[%s497 + $0x83] sm:$0xff]
        %v1707 = vld [vmem:[%s497 + $0x8b] sm:$0xff]
        %v1708 = vld [vmem:[%s497 + $0x93] sm:$0xff]
        %v1709 = vld [vmem:[%s497 + $0x9b] sm:$0xff]
        %v1710 = vadd.f32 %v1604, %v1692
        %v1711 = vadd.f32 %v1609, %v1693
        %v1712 = vadd.f32 %v1614, %v1694
        %v1713 = vadd.f32 %v1619, %v1695
        %v1714 = vadd.f32 %v1624, %v1696
        %v1715 = vadd.f32 %v1629, %v1697
        %v1716 = vadd.f32 %v1634, %v1698
        %v1717 = vadd.f32 %v1639, %v1699
        %v1718 = vadd.f32 %v1644, %v1700
        %v1719 = vadd.f32 %v1649, %v1701
        %v1720 = vadd.f32 %v1654, %v1702
        %v1721 = vadd.f32 %v1659, %v1703
        %v1722 = vadd.f32 %v1664, %v1704
        %v1723 = vadd.f32 %v1669, %v1705
        %v1724 = vadd.f32 %v1674, %v1706
        %v1725 = vadd.f32 %v1679, %v1707
        %v1726 = vadd.f32 %v1684, %v1708
        %v1727 = vadd.f32 %v1689, %v1709
        %1728 = vst [vmem:[%s271] sm:$0xff] %v1710
        %1729 = vst [vmem:[%s271 + $0x8] sm:$0xff] %v1711
        %1730 = vst [vmem:[%s271 + $0x10] sm:$0xff] %v1712
        %1731 = vst [vmem:[%s271 + $0x18] sm:$0xff] %v1713
        %1732 = vst [vmem:[%s271 + $0x20] sm:$0xff] %v1714
        %1733 = vst [vmem:[%s271 + $0x28] sm:$0xff] %v1715
        %1734 = vst [vmem:[%s271 + $0x30] sm:$0xff] %v1716
        %1735 = vst [vmem:[%s271 + $0x38] sm:$0xff] %v1717
        %1736 = vst [vmem:[%s271 + $0x40] sm:$0xff] %v1718
        %1737 = vst [vmem:[%s271 + $0x48] sm:$0xff] %v1719
        %1738 = vst [vmem:[%s271 + $0x50] sm:$0xff] %v1720
        %1739 = vst [vmem:[%s271 + $0x58] sm:$0xff] %v1721
        %1740 = vst [vmem:[%s271 + $0x60] sm:$0xff] %v1722
        %1741 = vst [vmem:[%s271 + $0x68] sm:$0xff] %v1723
        %1742 = vst [vmem:[%s271 + $0x70] sm:$0xff] %v1724
        %1743 = vst [vmem:[%s271 + $0x78] sm:$0xff] %v1725
        %1744 = vst [vmem:[%s271 + $0x80] sm:$0xff] %v1726
        %1745 = vst [vmem:[%s271 + $0x88] sm:$0xff] %v1727
        %s1746 = sand.u32 %s191, 1
        %s1747 = scalar_lea.sflag [#allocation6], %s1746
        %s1748 = sand.u32 %s191, 1
        %s1749 = smul.addr %s1748, 144
        %s1750 = scalar_lea.vmem [#allocation5], %s1749
        // Predicated region
        $region131: #{tpu_custom_call.1} parent=47 // pred_check
          %p1751 = pneg %p201
        $region132: #{tpu_custom_call.1} parent=47 // pred_check_branch
          %1753 = sbr.rel (%p1751) target = $region134
        $region133: #{tpu_custom_call.1} parent=47 // pred_region
          %s1754 = smul.u32 18, %s27
          %s1756 = ssub.s32 2304, 2304
          %1757 = vsyncadd %s1747, %s1756
          %s1758 = smul.addr %s26, 36
          %s1759 = sadd.s32 %s1754, %s1758
          %s1760 = smul.addr %s1759, 128
          %s1761 = scalar_lea.hbm %s8, %s1760
          %s1762 = sshll.u32 %s1750, 4
          %s1763 = int_to_ptr.vmem [resolvable:$true] %s1762
          %1768 = dma.vmem_to_hbm [thread:$0]  %s1763, 2304, %s1761, %s1747, 128, 128, 8
        $region134: #{tpu_custom_call.1} parent=47 // pred_fallthru
          _
      $region48: #{tpu_custom_call.1} parent=5 // pred_fallthru
        _
      %p1769 = scmp.le.s32.totalorder 2, %s17
      // Predicated region
      $region135: #{tpu_custom_call.1} parent=5 // pred_check
        %p1770 = pneg %p1769
      $region136: #{tpu_custom_call.1} parent=5 // pred_check_branch
        %1772 = sbr.rel (%p1770) target = $region138
      $region137: #{tpu_custom_call.1} parent=5 // pred_region
        %s1773 = ssub.s32 %s17, 2
        // Predicated region
        $region139: #{tpu_custom_call.1} parent=137 // pred_check
          %p1774 = pneg %p207
        $region140: #{tpu_custom_call.1} parent=137 // pred_check_branch
          %1776 = sbr.rel (%p1774) target = $region142
        $region141: #{tpu_custom_call.1} parent=137 // pred_region
          %s1777 = sand.u32 %s192, 1
          %s1778 = scalar_lea.sflag [#allocation6], %s1777
          %s1779 = sand.u32 %s192, 1
          %s1780 = smul.addr %s1779, 144
          %s1781 = scalar_lea.vmem [#allocation5], %s1780
          %1782 = dma.done %s1778, 2304
        $region142: #{tpu_custom_call.1} parent=137 // pred_fallthru
          _
      $region138: #{tpu_custom_call.1} parent=5 // pred_fallthru
        _
    $region6: #{tpu_custom_call.1} parent=1 // loop_footer
      %s21 = sadd.s32 1, %s17
    $region7: #{tpu_custom_call.1} parent=1 // loop_footer_branch
      %16 = sbr.rel target = $region3
    $region8: #{tpu_custom_call.1} parent=1 // loop_exit
      _
    %1783 = vsyncpa [#allocation6], 1
    %s1784 = scalar_lea.sflag [#allocation6], 1
    %1785 = vsyncpa %s1784, 1
  %1786 = vsyncmov [#allocation4]
  %s1787 = vpop.sfrf %1786
  %p1788 = scmp.eq.s32.totalorder %s1787, 0
  %p1789 = pneg %p1788
  %1791 = shalt.err (%p1789)
  %s1792 = scalar_lea.sflag [#allocation4], 1
  %1793 = vsyncmov %s1792
  %s1794 = vpop.sfrf %1793
  %p1795 = scmp.eq.s32.totalorder %s1794, 0
  %p1796 = pneg %p1795
  %1798 = shalt.err (%p1796)

</llo_original>
